<compile_context>
chip_gen: v7x
topology: tpu7x:2x2x1
jax: 0.10.0
libtpu: 0.0.40
codegen_flags: <defaults>
</compile_context>

<pallas_src>
import functools
import math

import jax
import jax.numpy as jnp
from jax.experimental import pallas as pl
from jax.experimental.pallas import tpu as pltpu


# ----------------------------- helpers (traced inside the kernel) ------------

def _layernorm(x, gamma, beta, eps):
    mean = jnp.mean(x, axis=-1, keepdims=True)
    var = jnp.mean((x - mean) ** 2, axis=-1, keepdims=True)
    inv = jax.lax.rsqrt(var + eps)
    return (x - mean) * inv * gamma + beta


def _gelu_tanh(x):
    # Siglip uses the tanh-approx GELU ("gelu_pytorch_tanh").
    c = math.sqrt(2.0 / math.pi)
    return 0.5 * x * (1.0 + jnp.tanh(c * (x + 0.044715 * x * x * x)))


# ----------------------------- fused kernel ----------------------------------

def siglip_kernel(patches_ref, w_patch, pos_bias,
                  ln1_g, ln1_b,
                  w_qkv, b_qkv, wo_h, bo,
                  ln2_g, ln2_b,
                  w1, b1, w2, b2,
                  pln_g, pln_b,
                  out_ref,
                  *, num_heads, eps):
    d = out_ref.shape[2]
    dh = d // num_heads

    # --- patch embedding (strided conv as matmul) + position embedding ------
    p = patches_ref[0].astype(jnp.bfloat16)                     # (N, K)
    x = jnp.dot(p, w_patch[...], preferred_element_type=jnp.float32)
    x = x + pos_bias[...]                                       # (N, D) f32

    # --- layer_norm1 + self attention + residual -----------------------------
    residual = x
    h = _layernorm(x, ln1_g[...], ln1_b[...], eps).astype(jnp.bfloat16)

    # fused QKV projection: one MXU pass.  dh**-0.5 already folded into the
    # Q columns of w_qkv / b_qkv at parameter-prep time.
    qkv = jnp.dot(h, w_qkv[...], preferred_element_type=jnp.float32) + b_qkv[...]

    def split_heads(t2d):                                       # (N, D) -> (nh, N, dh)
        return jnp.stack(
            [t2d[:, i * dh:(i + 1) * dh] for i in range(num_heads)],
            axis=0).astype(jnp.bfloat16)

    q = split_heads(qkv[:, 0 * d:1 * d])
    k = split_heads(qkv[:, 1 * d:2 * d])
    v = split_heads(qkv[:, 2 * d:3 * d])

    # head-batched attention (leading batch dim -> batched MXU issues)
    s = jnp.einsum('hqd,hkd->hqk', q, k,
                   preferred_element_type=jnp.float32)          # (nh, N, N) f32
    s = s - jnp.max(s, axis=-1, keepdims=True)
    e = jnp.exp(s)
    denom = jnp.sum(e, axis=-1, keepdims=True)
    pa = e * pl.reciprocal(denom, approx=True)                  # softmax (f32)

    ctx = jnp.einsum('hqk,hkd->hqd', pa.astype(jnp.bfloat16), v,
                     preferred_element_type=jnp.float32)        # (nh, N, dh)

    # output projection, head-batched then reduced over heads:
    #   sum_h ctx[h] @ Wo[h*dh:(h+1)*dh, :]  ==  concat(ctx) @ Wo
    attn = jnp.einsum('hqd,hdm->hqm', ctx.astype(jnp.bfloat16), wo_h[...],
                      preferred_element_type=jnp.float32)       # (nh, N, D)
    attn = jnp.sum(attn, axis=0) + bo[...]
    h1 = residual + attn

    # --- layer_norm2 + MLP (no second residual, matching the reference) -----
    h2 = _layernorm(h1, ln2_g[...], ln2_b[...], eps).astype(jnp.bfloat16)
    m = jnp.dot(h2, w1[...], preferred_element_type=jnp.float32) + b1[...]
    m = _gelu_tanh(m)                                           # f32
    m = jnp.dot(m.astype(jnp.bfloat16), w2[...],
                preferred_element_type=jnp.float32) + b2[...]

    # --- post_layernorm of SiglipVisionTransformer --------------------------
    out = _layernorm(m, pln_g[...], pln_b[...], eps)
    out_ref[0] = out.astype(out_ref.dtype)


# ----------------------------- parameter construction ------------------------

def init_params(key, *, num_channels, patch_size, hidden_size,
                intermediate_size, num_patches):
    ks = jax.random.split(key, 8)
    std = 0.02
    D, I, P, C, N = hidden_size, intermediate_size, patch_size, num_channels, num_patches
    params = {
        # conv weight in PyTorch layout (D, C, P, P)
        "patch_w": jax.random.normal(ks[0], (D, C, P, P), jnp.float32) * std,
        "patch_b": jnp.zeros((D,), jnp.float32),
        "pos_emb": jax.random.normal(ks[1], (N, D), jnp.float32) * std,
        "ln1_g": jnp.ones((D,), jnp.float32),
        "ln1_b": jnp.zeros((D,), jnp.float32),
        # attention projections stored as (in, out) so kernel does x @ W
        "wq": jax.random.normal(ks[2], (D, D), jnp.float32) * std,
        "bq": jnp.zeros((D,), jnp.float32),
        "wk": jax.random.normal(ks[3], (D, D), jnp.float32) * std,
        "bk": jnp.zeros((D,), jnp.float32),
        "wv": jax.random.normal(ks[4], (D, D), jnp.float32) * std,
        "bv": jnp.zeros((D,), jnp.float32),
        "wo": jax.random.normal(ks[5], (D, D), jnp.float32) * std,
        "bo": jnp.zeros((D,), jnp.float32),
        "ln2_g": jnp.ones((D,), jnp.float32),
        "ln2_b": jnp.zeros((D,), jnp.float32),
        "w1": jax.random.normal(ks[6], (D, I), jnp.float32) * std,
        "b1": jnp.zeros((I,), jnp.float32),
        "w2": jax.random.normal(ks[7], (I, D), jnp.float32) * std,
        "b2": jnp.zeros((D,), jnp.float32),
        "pln_g": jnp.ones((D,), jnp.float32),
        "pln_b": jnp.zeros((D,), jnp.float32),
    }
    return params


# ----------------------------- wrapper ---------------------------------------

def siglip_vision_model(pixel_values, params, *, patch_size, hidden_size,
                        intermediate_size, num_heads, layer_norm_eps=1e-6):
    B, C, H, W = pixel_values.shape
    P = patch_size
    D = hidden_size
    I = intermediate_size
    Hp, Wp = H // P, W // P
    N = Hp * Wp
    K = C * P * P
    dh = D // num_heads

    # --- glue: extract non-overlapping patches (conv with stride = kernel) ---
    x = pixel_values.reshape(B, C, Hp, P, Wp, P)
    patches = x.transpose(0, 2, 4, 1, 3, 5).reshape(B, N, K)    # (B, N, C*P*P)

    # conv weight (D, C, P, P) -> matmul weight (K, D); same (C,P,P) flatten order
    w_patch = params["patch_w"].reshape(D, K).T.astype(jnp.bfloat16)
    # fold conv bias into the position embedding: one add inside the kernel
    pos_bias = params["pos_emb"] + params["patch_b"].reshape(1, D)

    # fused QKV weight/bias with the attention scale folded into the Q part
    scale = dh ** -0.5
    w_qkv = jnp.concatenate(
        [params["wq"] * scale, params["wk"], params["wv"]], axis=1
    ).astype(jnp.bfloat16)                                       # (D, 3D)
    b_qkv = jnp.concatenate(
        [params["bq"] * scale, params["bk"], params["bv"]]
    ).reshape(1, 3 * D)
    # output projection reshaped per head: (num_heads, dh, D)
    wo_h = params["wo"].reshape(num_heads, dh, D).astype(jnp.bfloat16)

    param_arrays = [
        w_patch, pos_bias,
        params["ln1_g"].reshape(1, D), params["ln1_b"].reshape(1, D),
        w_qkv, b_qkv, wo_h, params["bo"].reshape(1, D),
        params["ln2_g"].reshape(1, D), params["ln2_b"].reshape(1, D),
        params["w1"].astype(jnp.bfloat16), params["b1"].reshape(1, I),
        params["w2"].astype(jnp.bfloat16), params["b2"].reshape(1, D),
        params["pln_g"].reshape(1, D), params["pln_b"].reshape(1, D),
    ]

    def const_spec(a):
        zeros = (0,) * a.ndim
        return pl.BlockSpec(a.shape, lambda b, z=zeros: z)

    kernel = functools.partial(siglip_kernel, num_heads=num_heads,
                               eps=layer_norm_eps)

    out = pl.pallas_call(
        kernel,
        out_shape=jax.ShapeDtypeStruct((B, N, D), jnp.float32),
        grid=(B,),
        in_specs=[pl.BlockSpec((1, N, K), lambda b: (b, 0, 0))]
                 + [const_spec(a) for a in param_arrays],
        out_specs=pl.BlockSpec((1, N, D), lambda b: (b, 0, 0)),
        compiler_params=pltpu.CompilerParams(
            dimension_semantics=("parallel",),
            vmem_limit_bytes=64 * 1024 * 1024),
    )(patches, *param_arrays)

    return out


# ----------------------------- main -------------------------------------------

if __name__ == "__main__":
    # Small, forward-consistent config.
    batch = 2
    num_channels = 3
    image_size = 32
    patch_size = 8
    hidden_size = 128
    intermediate_size = 256
    num_heads = 4
    num_patches = (image_size // patch_size) ** 2   # 16

    key = jax.random.PRNGKey(0)
    k_params, k_input = jax.random.split(key)

    params = init_params(
        k_params,
        num_channels=num_channels,
        patch_size=patch_size,
        hidden_size=hidden_size,
        intermediate_size=intermediate_size,
        num_patches=num_patches,
    )

    pixel_values = jax.random.normal(
        k_input, (batch, num_channels, image_size, image_size), jnp.float32)

    out = siglip_vision_model(
        pixel_values, params,
        patch_size=patch_size,
        hidden_size=hidden_size,
        intermediate_size=intermediate_size,
        num_heads=num_heads,
        layer_norm_eps=1e-6,
    )
    out = jax.block_until_ready(out)
    assert out.shape == (batch, num_patches, hidden_size)
    assert bool(jnp.all(jnp.isfinite(out)))
    print("KERNEL_OK")
</pallas_src>

<mosaic_0001>
module attributes {stable_mosaic.version = 11 : i64} {
  func.func @siglip_kernel(%arg0: i32, %arg1: memref<1x16x192xf32, #tpu.memory_space<vmem>>, %arg2: memref<192x128xbf16, #tpu.memory_space<vmem>>, %arg3: memref<16x128xf32, #tpu.memory_space<vmem>>, %arg4: memref<1x128xf32, #tpu.memory_space<vmem>>, %arg5: memref<1x128xf32, #tpu.memory_space<vmem>>, %arg6: memref<128x384xbf16, #tpu.memory_space<vmem>>, %arg7: memref<1x384xf32, #tpu.memory_space<vmem>>, %arg8: memref<4x32x128xbf16, #tpu.memory_space<vmem>>, %arg9: memref<1x128xf32, #tpu.memory_space<vmem>>, %arg10: memref<1x128xf32, #tpu.memory_space<vmem>>, %arg11: memref<1x128xf32, #tpu.memory_space<vmem>>, %arg12: memref<128x256xbf16, #tpu.memory_space<vmem>>, %arg13: memref<1x256xf32, #tpu.memory_space<vmem>>, %arg14: memref<256x128xbf16, #tpu.memory_space<vmem>>, %arg15: memref<1x128xf32, #tpu.memory_space<vmem>>, %arg16: memref<1x128xf32, #tpu.memory_space<vmem>>, %arg17: memref<1x128xf32, #tpu.memory_space<vmem>>, %arg18: memref<1x16x128xf32, #tpu.memory_space<vmem>>) attributes {dimension_semantics = [#tpu.dimension_semantics<parallel>], iteration_bounds = array<i64: 2>, scalar_prefetch = 0 : i64, scratch_operands = 0 : i64, tpu.core_type = #tpu.core_type<tc>, window_params = [{transform_indices = @transform_0, window_bounds = array<i64: 1, 16, 192>}, {pipeline_mode = #tpu.pipeline_mode<synchronous>, transform_indices = @transform_1, window_bounds = array<i64: 192, 128>}, {pipeline_mode = #tpu.pipeline_mode<synchronous>, transform_indices = @transform_2, window_bounds = array<i64: 16, 128>}, {pipeline_mode = #tpu.pipeline_mode<synchronous>, transform_indices = @transform_3, window_bounds = array<i64: 1, 128>}, {pipeline_mode = #tpu.pipeline_mode<synchronous>, transform_indices = @transform_4, window_bounds = array<i64: 1, 128>}, {pipeline_mode = #tpu.pipeline_mode<synchronous>, transform_indices = @transform_5, window_bounds = array<i64: 128, 384>}, {pipeline_mode = #tpu.pipeline_mode<synchronous>, transform_indices = @transform_6, window_bounds = array<i64: 1, 384>}, {pipeline_mode = #tpu.pipeline_mode<synchronous>, transform_indices = @transform_7, window_bounds = array<i64: 4, 32, 128>}, {pipeline_mode = #tpu.pipeline_mode<synchronous>, transform_indices = @transform_8, window_bounds = array<i64: 1, 128>}, {pipeline_mode = #tpu.pipeline_mode<synchronous>, transform_indices = @transform_9, window_bounds = array<i64: 1, 128>}, {pipeline_mode = #tpu.pipeline_mode<synchronous>, transform_indices = @transform_10, window_bounds = array<i64: 1, 128>}, {pipeline_mode = #tpu.pipeline_mode<synchronous>, transform_indices = @transform_11, window_bounds = array<i64: 128, 256>}, {pipeline_mode = #tpu.pipeline_mode<synchronous>, transform_indices = @transform_12, window_bounds = array<i64: 1, 256>}, {pipeline_mode = #tpu.pipeline_mode<synchronous>, transform_indices = @transform_13, window_bounds = array<i64: 256, 128>}, {pipeline_mode = #tpu.pipeline_mode<synchronous>, transform_indices = @transform_14, window_bounds = array<i64: 1, 128>}, {pipeline_mode = #tpu.pipeline_mode<synchronous>, transform_indices = @transform_15, window_bounds = array<i64: 1, 128>}, {pipeline_mode = #tpu.pipeline_mode<synchronous>, transform_indices = @transform_16, window_bounds = array<i64: 1, 128>}, {transform_indices = @transform_17, window_bounds = array<i64: 1, 16, 128>}]} {
    %c0 = arith.constant 0 : index
    %c0_0 = arith.constant 0 : index
    %c0_1 = arith.constant 0 : index
    %0 = vector.load %arg1[%c0, %c0_0, %c0_1] : memref<1x16x192xf32, #tpu.memory_space<vmem>>, vector<1x16x192xf32>
    %1 = vector.shape_cast %0 : vector<1x16x192xf32> to vector<16x192xf32>
    %2 = arith.truncf %1 : vector<16x192xf32> to vector<16x192xbf16>
    %c0_2 = arith.constant 0 : index
    %c0_3 = arith.constant 0 : index
    %3 = vector.load %arg2[%c0_2, %c0_3] : memref<192x128xbf16, #tpu.memory_space<vmem>>, vector<192x128xbf16>
    %cst = arith.constant dense<0.000000e+00> : vector<16x128xf32>
    %4 = tpu.matmul %2, %3, %cst {dimension_numbers = #tpu.dot_dimension_numbers<[1], [0], [0], [1], [0, 0, 1, 1], [], []>} : vector<16x192xbf16>, vector<192x128xbf16>, vector<16x128xf32> -> vector<16x128xf32>
    %c0_4 = arith.constant 0 : index
    %c0_5 = arith.constant 0 : index
    %5 = vector.load %arg3[%c0_4, %c0_5] : memref<16x128xf32, #tpu.memory_space<vmem>>, vector<16x128xf32>
    %6 = arith.addf %4, %5 : vector<16x128xf32>
    %c0_6 = arith.constant 0 : index
    %c0_7 = arith.constant 0 : index
    %7 = vector.load %arg4[%c0_6, %c0_7] : memref<1x128xf32, #tpu.memory_space<vmem>>, vector<1x128xf32>
    %c0_8 = arith.constant 0 : index
    %c0_9 = arith.constant 0 : index
    %8 = vector.load %arg5[%c0_8, %c0_9] : memref<1x128xf32, #tpu.memory_space<vmem>>, vector<1x128xf32>
    %cst_10 = arith.constant dense<0.000000e+00> : vector<16xf32>
    %9 = vector.multi_reduction <add>, %6, %cst_10 [1] : vector<16x128xf32> to vector<16xf32>
    %10 = vector.shape_cast %9 : vector<16xf32> to vector<16x1xf32>
    %cst_11 = arith.constant 1.280000e+02 : f32
    %11 = vector.broadcast %cst_11 : f32 to vector<16x1xf32>
    %12 = arith.divf %10, %11 : vector<16x1xf32>
    %13 = vector.broadcast %12 : vector<16x1xf32> to vector<16x128xf32>
    %14 = arith.subf %6, %13 : vector<16x128xf32>
    %15 = arith.mulf %14, %14 : vector<16x128xf32>
    %cst_12 = arith.constant dense<0.000000e+00> : vector<16xf32>
    %16 = vector.multi_reduction <add>, %15, %cst_12 [1] : vector<16x128xf32> to vector<16xf32>
    %17 = vector.shape_cast %16 : vector<16xf32> to vector<16x1xf32>
    %cst_13 = arith.constant 1.280000e+02 : f32
    %18 = vector.broadcast %cst_13 : f32 to vector<16x1xf32>
    %19 = arith.divf %17, %18 : vector<16x1xf32>
    %cst_14 = arith.constant 9.99999997E-7 : f32
    %20 = vector.broadcast %cst_14 : f32 to vector<16x1xf32>
    %21 = arith.addf %19, %20 : vector<16x1xf32>
    %22 = math.rsqrt %21 : vector<16x1xf32>
    %23 = vector.broadcast %12 : vector<16x1xf32> to vector<16x128xf32>
    %24 = arith.subf %6, %23 : vector<16x128xf32>
    %25 = vector.broadcast %22 : vector<16x1xf32> to vector<16x128xf32>
    %26 = arith.mulf %24, %25 : vector<16x128xf32>
    %27 = vector.broadcast %7 : vector<1x128xf32> to vector<16x128xf32>
    %28 = arith.mulf %26, %27 : vector<16x128xf32>
    %29 = vector.broadcast %8 : vector<1x128xf32> to vector<16x128xf32>
    %30 = arith.addf %28, %29 : vector<16x128xf32>
    %31 = arith.truncf %30 : vector<16x128xf32> to vector<16x128xbf16>
    %c0_15 = arith.constant 0 : index
    %c0_16 = arith.constant 0 : index
    %32 = vector.load %arg6[%c0_15, %c0_16] : memref<128x384xbf16, #tpu.memory_space<vmem>>, vector<128x384xbf16>
    %cst_17 = arith.constant dense<0.000000e+00> : vector<16x384xf32>
    %33 = tpu.matmul %31, %32, %cst_17 {dimension_numbers = #tpu.dot_dimension_numbers<[1], [0], [0], [1], [0, 0, 1, 1], [], []>} : vector<16x128xbf16>, vector<128x384xbf16>, vector<16x384xf32> -> vector<16x384xf32>
    %c0_18 = arith.constant 0 : index
    %c0_19 = arith.constant 0 : index
    %34 = vector.load %arg7[%c0_18, %c0_19] : memref<1x384xf32, #tpu.memory_space<vmem>>, vector<1x384xf32>
    %35 = vector.broadcast %34 : vector<1x384xf32> to vector<16x384xf32>
    %36 = arith.addf %33, %35 : vector<16x384xf32>
    %37 = vector.extract_strided_slice %36 {offsets = [0, 0], sizes = [16, 128], strides = [1, 1]} : vector<16x384xf32> to vector<16x128xf32>
    %38 = vector.extract_strided_slice %37 {offsets = [0, 0], sizes = [16, 32], strides = [1, 1]} : vector<16x128xf32> to vector<16x32xf32>
    %39 = vector.extract_strided_slice %37 {offsets = [0, 32], sizes = [16, 32], strides = [1, 1]} : vector<16x128xf32> to vector<16x32xf32>
    %40 = vector.extract_strided_slice %37 {offsets = [0, 64], sizes = [16, 32], strides = [1, 1]} : vector<16x128xf32> to vector<16x32xf32>
    %41 = vector.extract_strided_slice %37 {offsets = [0, 96], sizes = [16, 32], strides = [1, 1]} : vector<16x128xf32> to vector<16x32xf32>
    %42 = vector.shape_cast %38 : vector<16x32xf32> to vector<1x16x32xf32>
    %43 = vector.shape_cast %39 : vector<16x32xf32> to vector<1x16x32xf32>
    %44 = vector.shape_cast %40 : vector<16x32xf32> to vector<1x16x32xf32>
    %45 = vector.shape_cast %41 : vector<16x32xf32> to vector<1x16x32xf32>
    %46 = tpu.concatenate %42, %43, %44, %45 in 0 : vector<1x16x32xf32>, vector<1x16x32xf32>, vector<1x16x32xf32>, vector<1x16x32xf32> -> vector<4x16x32xf32>
    %47 = arith.truncf %46 : vector<4x16x32xf32> to vector<4x16x32xbf16>
    %48 = vector.extract_strided_slice %36 {offsets = [0, 128], sizes = [16, 128], strides = [1, 1]} : vector<16x384xf32> to vector<16x128xf32>
    %49 = vector.extract_strided_slice %48 {offsets = [0, 0], sizes = [16, 32], strides = [1, 1]} : vector<16x128xf32> to vector<16x32xf32>
    %50 = vector.extract_strided_slice %48 {offsets = [0, 32], sizes = [16, 32], strides = [1, 1]} : vector<16x128xf32> to vector<16x32xf32>
    %51 = vector.extract_strided_slice %48 {offsets = [0, 64], sizes = [16, 32], strides = [1, 1]} : vector<16x128xf32> to vector<16x32xf32>
    %52 = vector.extract_strided_slice %48 {offsets = [0, 96], sizes = [16, 32], strides = [1, 1]} : vector<16x128xf32> to vector<16x32xf32>
    %53 = vector.shape_cast %49 : vector<16x32xf32> to vector<1x16x32xf32>
    %54 = vector.shape_cast %50 : vector<16x32xf32> to vector<1x16x32xf32>
    %55 = vector.shape_cast %51 : vector<16x32xf32> to vector<1x16x32xf32>
    %56 = vector.shape_cast %52 : vector<16x32xf32> to vector<1x16x32xf32>
    %57 = tpu.concatenate %53, %54, %55, %56 in 0 : vector<1x16x32xf32>, vector<1x16x32xf32>, vector<1x16x32xf32>, vector<1x16x32xf32> -> vector<4x16x32xf32>
    %58 = arith.truncf %57 : vector<4x16x32xf32> to vector<4x16x32xbf16>
    %59 = vector.extract_strided_slice %36 {offsets = [0, 256], sizes = [16, 128], strides = [1, 1]} : vector<16x384xf32> to vector<16x128xf32>
    %60 = vector.extract_strided_slice %59 {offsets = [0, 0], sizes = [16, 32], strides = [1, 1]} : vector<16x128xf32> to vector<16x32xf32>
    %61 = vector.extract_strided_slice %59 {offsets = [0, 32], sizes = [16, 32], strides = [1, 1]} : vector<16x128xf32> to vector<16x32xf32>
    %62 = vector.extract_strided_slice %59 {offsets = [0, 64], sizes = [16, 32], strides = [1, 1]} : vector<16x128xf32> to vector<16x32xf32>
    %63 = vector.extract_strided_slice %59 {offsets = [0, 96], sizes = [16, 32], strides = [1, 1]} : vector<16x128xf32> to vector<16x32xf32>
    %64 = vector.shape_cast %60 : vector<16x32xf32> to vector<1x16x32xf32>
    %65 = vector.shape_cast %61 : vector<16x32xf32> to vector<1x16x32xf32>
    %66 = vector.shape_cast %62 : vector<16x32xf32> to vector<1x16x32xf32>
    %67 = vector.shape_cast %63 : vector<16x32xf32> to vector<1x16x32xf32>
    %68 = tpu.concatenate %64, %65, %66, %67 in 0 : vector<1x16x32xf32>, vector<1x16x32xf32>, vector<1x16x32xf32>, vector<1x16x32xf32> -> vector<4x16x32xf32>
    %69 = arith.truncf %68 : vector<4x16x32xf32> to vector<4x16x32xbf16>
    "tpu.trace_start"() <{level = 10 : i32, message = "hqd,hkd->hqk"}> : () -> ()
    %cst_20 = arith.constant dense<0.000000e+00> : vector<4x16x16xf32>
    %70 = tpu.matmul %47, %58, %cst_20 {dimension_numbers = #tpu.dot_dimension_numbers<[2], [2], [1], [1], [0, 0, 0, 1, 1, 1], [0], [0]>} : vector<4x16x32xbf16>, vector<4x16x32xbf16>, vector<4x16x16xf32> -> vector<4x16x16xf32>
    "tpu.trace_stop"() : () -> ()
    %cst_21 = arith.constant dense<0xFF800000> : vector<4x16xf32>
    %71 = vector.multi_reduction <maximumf>, %70, %cst_21 [2] : vector<4x16x16xf32> to vector<4x16xf32>
    %72 = vector.shape_cast %71 : vector<4x16xf32> to vector<4x16x1xf32>
    %73 = vector.broadcast %72 : vector<4x16x1xf32> to vector<4x16x16xf32>
    %74 = arith.subf %70, %73 : vector<4x16x16xf32>
    %75 = math.exp %74 : vector<4x16x16xf32>
    %cst_22 = arith.constant dense<0.000000e+00> : vector<4x16xf32>
    %76 = vector.multi_reduction <add>, %75, %cst_22 [2] : vector<4x16x16xf32> to vector<4x16xf32>
    %77 = vector.shape_cast %76 : vector<4x16xf32> to vector<4x16x1xf32>
    %78 = tpu.reciprocal %77 {approx = true} : vector<4x16x1xf32> -> vector<4x16x1xf32>
    %79 = vector.broadcast %78 : vector<4x16x1xf32> to vector<4x16x16xf32>
    %80 = arith.mulf %75, %79 : vector<4x16x16xf32>
    %81 = arith.truncf %80 : vector<4x16x16xf32> to vector<4x16x16xbf16>
    "tpu.trace_start"() <{level = 10 : i32, message = "hqk,hkd->hqd"}> : () -> ()
    %cst_23 = arith.constant dense<0.000000e+00> : vector<4x16x32xf32>
    %82 = tpu.matmul %81, %69, %cst_23 {dimension_numbers = #tpu.dot_dimension_numbers<[2], [1], [1], [2], [0, 0, 0, 1, 1, 2], [0], [0]>} : vector<4x16x16xbf16>, vector<4x16x32xbf16>, vector<4x16x32xf32> -> vector<4x16x32xf32>
    "tpu.trace_stop"() : () -> ()
    %83 = arith.truncf %82 : vector<4x16x32xf32> to vector<4x16x32xbf16>
    %c0_24 = arith.constant 0 : index
    %c0_25 = arith.constant 0 : index
    %c0_26 = arith.constant 0 : index
    %84 = vector.load %arg8[%c0_24, %c0_25, %c0_26] : memref<4x32x128xbf16, #tpu.memory_space<vmem>>, vector<4x32x128xbf16>
    "tpu.trace_start"() <{level = 10 : i32, message = "hqd,hdm->hqm"}> : () -> ()
    %cst_27 = arith.constant dense<0.000000e+00> : vector<4x16x128xf32>
    %85 = tpu.matmul %83, %84, %cst_27 {dimension_numbers = #tpu.dot_dimension_numbers<[2], [1], [1], [2], [0, 0, 0, 1, 1, 2], [0], [0]>} : vector<4x16x32xbf16>, vector<4x32x128xbf16>, vector<4x16x128xf32> -> vector<4x16x128xf32>
    "tpu.trace_stop"() : () -> ()
    %cst_28 = arith.constant dense<0.000000e+00> : vector<16x128xf32>
    %86 = vector.multi_reduction <add>, %85, %cst_28 [0] : vector<4x16x128xf32> to vector<16x128xf32>
    %c0_29 = arith.constant 0 : index
    %c0_30 = arith.constant 0 : index
    %87 = vector.load %arg9[%c0_29, %c0_30] : memref<1x128xf32, #tpu.memory_space<vmem>>, vector<1x128xf32>
    %88 = vector.broadcast %87 : vector<1x128xf32> to vector<16x128xf32>
    %89 = arith.addf %86, %88 : vector<16x128xf32>
    %90 = arith.addf %6, %89 : vector<16x128xf32>
    %c0_31 = arith.constant 0 : index
    %c0_32 = arith.constant 0 : index
    %91 = vector.load %arg10[%c0_31, %c0_32] : memref<1x128xf32, #tpu.memory_space<vmem>>, vector<1x128xf32>
    %c0_33 = arith.constant 0 : index
    %c0_34 = arith.constant 0 : index
    %92 = vector.load %arg11[%c0_33, %c0_34] : memref<1x128xf32, #tpu.memory_space<vmem>>, vector<1x128xf32>
    %cst_35 = arith.constant dense<0.000000e+00> : vector<16xf32>
    %93 = vector.multi_reduction <add>, %90, %cst_35 [1] : vector<16x128xf32> to vector<16xf32>
    %94 = vector.shape_cast %93 : vector<16xf32> to vector<16x1xf32>
    %cst_36 = arith.constant 1.280000e+02 : f32
    %95 = vector.broadcast %cst_36 : f32 to vector<16x1xf32>
    %96 = arith.divf %94, %95 : vector<16x1xf32>
    %97 = vector.broadcast %96 : vector<16x1xf32> to vector<16x128xf32>
    %98 = arith.subf %90, %97 : vector<16x128xf32>
    %99 = arith.mulf %98, %98 : vector<16x128xf32>
    %cst_37 = arith.constant dense<0.000000e+00> : vector<16xf32>
    %100 = vector.multi_reduction <add>, %99, %cst_37 [1] : vector<16x128xf32> to vector<16xf32>
    %101 = vector.shape_cast %100 : vector<16xf32> to vector<16x1xf32>
    %cst_38 = arith.constant 1.280000e+02 : f32
    %102 = vector.broadcast %cst_38 : f32 to vector<16x1xf32>
    %103 = arith.divf %101, %102 : vector<16x1xf32>
    %cst_39 = arith.constant 9.99999997E-7 : f32
    %104 = vector.broadcast %cst_39 : f32 to vector<16x1xf32>
    %105 = arith.addf %103, %104 : vector<16x1xf32>
    %106 = math.rsqrt %105 : vector<16x1xf32>
    %107 = vector.broadcast %96 : vector<16x1xf32> to vector<16x128xf32>
    %108 = arith.subf %90, %107 : vector<16x128xf32>
    %109 = vector.broadcast %106 : vector<16x1xf32> to vector<16x128xf32>
    %110 = arith.mulf %108, %109 : vector<16x128xf32>
    %111 = vector.broadcast %91 : vector<1x128xf32> to vector<16x128xf32>
    %112 = arith.mulf %110, %111 : vector<16x128xf32>
    %113 = vector.broadcast %92 : vector<1x128xf32> to vector<16x128xf32>
    %114 = arith.addf %112, %113 : vector<16x128xf32>
    %115 = arith.truncf %114 : vector<16x128xf32> to vector<16x128xbf16>
    %c0_40 = arith.constant 0 : index
    %c0_41 = arith.constant 0 : index
    %116 = vector.load %arg12[%c0_40, %c0_41] : memref<128x256xbf16, #tpu.memory_space<vmem>>, vector<128x256xbf16>
    %cst_42 = arith.constant dense<0.000000e+00> : vector<16x256xf32>
    %117 = tpu.matmul %115, %116, %cst_42 {dimension_numbers = #tpu.dot_dimension_numbers<[1], [0], [0], [1], [0, 0, 1, 1], [], []>} : vector<16x128xbf16>, vector<128x256xbf16>, vector<16x256xf32> -> vector<16x256xf32>
    %c0_43 = arith.constant 0 : index
    %c0_44 = arith.constant 0 : index
    %118 = vector.load %arg13[%c0_43, %c0_44] : memref<1x256xf32, #tpu.memory_space<vmem>>, vector<1x256xf32>
    %119 = vector.broadcast %118 : vector<1x256xf32> to vector<16x256xf32>
    %120 = arith.addf %117, %119 : vector<16x256xf32>
    %cst_45 = arith.constant 5.000000e-01 : f32
    %121 = vector.broadcast %cst_45 : f32 to vector<16x256xf32>
    %122 = arith.mulf %121, %120 : vector<16x256xf32>
    %cst_46 = arith.constant 4.471500e-02 : f32
    %123 = vector.broadcast %cst_46 : f32 to vector<16x256xf32>
    %124 = arith.mulf %123, %120 : vector<16x256xf32>
    %125 = arith.mulf %124, %120 : vector<16x256xf32>
    %126 = arith.mulf %125, %120 : vector<16x256xf32>
    %127 = arith.addf %120, %126 : vector<16x256xf32>
    %cst_47 = arith.constant 0.797884583 : f32
    %128 = vector.broadcast %cst_47 : f32 to vector<16x256xf32>
    %129 = arith.mulf %128, %127 : vector<16x256xf32>
    %130 = math.tanh %129 : vector<16x256xf32>
    %cst_48 = arith.constant 1.000000e+00 : f32
    %131 = vector.broadcast %cst_48 : f32 to vector<16x256xf32>
    %132 = arith.addf %131, %130 : vector<16x256xf32>
    %133 = arith.mulf %122, %132 : vector<16x256xf32>
    %134 = arith.truncf %133 : vector<16x256xf32> to vector<16x256xbf16>
    %c0_49 = arith.constant 0 : index
    %c0_50 = arith.constant 0 : index
    %135 = vector.load %arg14[%c0_49, %c0_50] : memref<256x128xbf16, #tpu.memory_space<vmem>>, vector<256x128xbf16>
    %cst_51 = arith.constant dense<0.000000e+00> : vector<16x128xf32>
    %136 = tpu.matmul %134, %135, %cst_51 {dimension_numbers = #tpu.dot_dimension_numbers<[1], [0], [0], [1], [0, 0, 1, 1], [], []>} : vector<16x256xbf16>, vector<256x128xbf16>, vector<16x128xf32> -> vector<16x128xf32>
    %c0_52 = arith.constant 0 : index
    %c0_53 = arith.constant 0 : index
    %137 = vector.load %arg15[%c0_52, %c0_53] : memref<1x128xf32, #tpu.memory_space<vmem>>, vector<1x128xf32>
    %138 = vector.broadcast %137 : vector<1x128xf32> to vector<16x128xf32>
    %139 = arith.addf %136, %138 : vector<16x128xf32>
    %c0_54 = arith.constant 0 : index
    %c0_55 = arith.constant 0 : index
    %140 = vector.load %arg16[%c0_54, %c0_55] : memref<1x128xf32, #tpu.memory_space<vmem>>, vector<1x128xf32>
    %c0_56 = arith.constant 0 : index
    %c0_57 = arith.constant 0 : index
    %141 = vector.load %arg17[%c0_56, %c0_57] : memref<1x128xf32, #tpu.memory_space<vmem>>, vector<1x128xf32>
    %cst_58 = arith.constant dense<0.000000e+00> : vector<16xf32>
    %142 = vector.multi_reduction <add>, %139, %cst_58 [1] : vector<16x128xf32> to vector<16xf32>
    %143 = vector.shape_cast %142 : vector<16xf32> to vector<16x1xf32>
    %cst_59 = arith.constant 1.280000e+02 : f32
    %144 = vector.broadcast %cst_59 : f32 to vector<16x1xf32>
    %145 = arith.divf %143, %144 : vector<16x1xf32>
    %146 = vector.broadcast %145 : vector<16x1xf32> to vector<16x128xf32>
    %147 = arith.subf %139, %146 : vector<16x128xf32>
    %148 = arith.mulf %147, %147 : vector<16x128xf32>
    %cst_60 = arith.constant dense<0.000000e+00> : vector<16xf32>
    %149 = vector.multi_reduction <add>, %148, %cst_60 [1] : vector<16x128xf32> to vector<16xf32>
    %150 = vector.shape_cast %149 : vector<16xf32> to vector<16x1xf32>
    %cst_61 = arith.constant 1.280000e+02 : f32
    %151 = vector.broadcast %cst_61 : f32 to vector<16x1xf32>
    %152 = arith.divf %150, %151 : vector<16x1xf32>
    %cst_62 = arith.constant 9.99999997E-7 : f32
    %153 = vector.broadcast %cst_62 : f32 to vector<16x1xf32>
    %154 = arith.addf %152, %153 : vector<16x1xf32>
    %155 = math.rsqrt %154 : vector<16x1xf32>
    %156 = vector.broadcast %145 : vector<16x1xf32> to vector<16x128xf32>
    %157 = arith.subf %139, %156 : vector<16x128xf32>
    %158 = vector.broadcast %155 : vector<16x1xf32> to vector<16x128xf32>
    %159 = arith.mulf %157, %158 : vector<16x128xf32>
    %160 = vector.broadcast %140 : vector<1x128xf32> to vector<16x128xf32>
    %161 = arith.mulf %159, %160 : vector<16x128xf32>
    %162 = vector.broadcast %141 : vector<1x128xf32> to vector<16x128xf32>
    %163 = arith.addf %161, %162 : vector<16x128xf32>
    %c0_63 = arith.constant 0 : index
    %c0_64 = arith.constant 0 : index
    %c0_65 = arith.constant 0 : index
    %164 = vector.load %arg18[%c0_63, %c0_64, %c0_65] : memref<1x16x128xf32, #tpu.memory_space<vmem>>, vector<1x16x128xf32>
    %165 = vector.shape_cast %164 : vector<1x16x128xf32> to vector<16x128xf32>
    %166 = vector.shape_cast %163 : vector<16x128xf32> to vector<1x16x128xf32>
    tpu.vector_store %arg18[%c0_63, %c0_64, %c0_65], %166 {strides = array<i32>} : memref<1x16x128xf32, #tpu.memory_space<vmem>>, vector<1x16x128xf32>,
    return
  }
  func.func @transform_0(%arg0: i32) -> (i32, i32, i32) {
    %c0_i32 = arith.constant 0 : i32
    %c0_i32_0 = arith.constant 0 : i32
    %c0_i32_1 = arith.constant 0 : i32
    return %arg0, %c0_i32, %c0_i32_0 : i32, i32, i32
  }
  func.func @transform_1(%arg0: i32) -> (i32, i32) {
    %c0_i32 = arith.constant 0 : i32
    %c0_i32_0 = arith.constant 0 : i32
    %c0_i32_1 = arith.constant 0 : i32
    return %c0_i32, %c0_i32_0 : i32, i32
  }
  func.func @transform_2(%arg0: i32) -> (i32, i32) {
    %c0_i32 = arith.constant 0 : i32
    %c0_i32_0 = arith.constant 0 : i32
    %c0_i32_1 = arith.constant 0 : i32
    return %c0_i32, %c0_i32_0 : i32, i32
  }
  func.func @transform_3(%arg0: i32) -> (i32, i32) {
    %c0_i32 = arith.constant 0 : i32
    %c0_i32_0 = arith.constant 0 : i32
    %c0_i32_1 = arith.constant 0 : i32
    return %c0_i32, %c0_i32_0 : i32, i32
  }
  func.func @transform_4(%arg0: i32) -> (i32, i32) {
    %c0_i32 = arith.constant 0 : i32
    %c0_i32_0 = arith.constant 0 : i32
    %c0_i32_1 = arith.constant 0 : i32
    return %c0_i32, %c0_i32_0 : i32, i32
  }
  func.func @transform_5(%arg0: i32) -> (i32, i32) {
    %c0_i32 = arith.constant 0 : i32
    %c0_i32_0 = arith.constant 0 : i32
    %c0_i32_1 = arith.constant 0 : i32
    return %c0_i32, %c0_i32_0 : i32, i32
  }
  func.func @transform_6(%arg0: i32) -> (i32, i32) {
    %c0_i32 = arith.constant 0 : i32
    %c0_i32_0 = arith.constant 0 : i32
    %c0_i32_1 = arith.constant 0 : i32
    return %c0_i32, %c0_i32_0 : i32, i32
  }
  func.func @transform_7(%arg0: i32) -> (i32, i32, i32) {
    %c0_i32 = arith.constant 0 : i32
    %c0_i32_0 = arith.constant 0 : i32
    %c0_i32_1 = arith.constant 0 : i32
    %c0_i32_2 = arith.constant 0 : i32
    return %c0_i32, %c0_i32_0, %c0_i32_1 : i32, i32, i32
  }
  func.func @transform_8(%arg0: i32) -> (i32, i32) {
    %c0_i32 = arith.constant 0 : i32
    %c0_i32_0 = arith.constant 0 : i32
    %c0_i32_1 = arith.constant 0 : i32
    return %c0_i32, %c0_i32_0 : i32, i32
  }
  func.func @transform_9(%arg0: i32) -> (i32, i32) {
    %c0_i32 = arith.constant 0 : i32
    %c0_i32_0 = arith.constant 0 : i32
    %c0_i32_1 = arith.constant 0 : i32
    return %c0_i32, %c0_i32_0 : i32, i32
  }
  func.func @transform_10(%arg0: i32) -> (i32, i32) {
    %c0_i32 = arith.constant 0 : i32
    %c0_i32_0 = arith.constant 0 : i32
    %c0_i32_1 = arith.constant 0 : i32
    return %c0_i32, %c0_i32_0 : i32, i32
  }
  func.func @transform_11(%arg0: i32) -> (i32, i32) {
    %c0_i32 = arith.constant 0 : i32
    %c0_i32_0 = arith.constant 0 : i32
    %c0_i32_1 = arith.constant 0 : i32
    return %c0_i32, %c0_i32_0 : i32, i32
  }
  func.func @transform_12(%arg0: i32) -> (i32, i32) {
    %c0_i32 = arith.constant 0 : i32
    %c0_i32_0 = arith.constant 0 : i32
    %c0_i32_1 = arith.constant 0 : i32
    return %c0_i32, %c0_i32_0 : i32, i32
  }
  func.func @transform_13(%arg0: i32) -> (i32, i32) {
    %c0_i32 = arith.constant 0 : i32
    %c0_i32_0 = arith.constant 0 : i32
    %c0_i32_1 = arith.constant 0 : i32
    return %c0_i32, %c0_i32_0 : i32, i32
  }
  func.func @transform_14(%arg0: i32) -> (i32, i32) {
    %c0_i32 = arith.constant 0 : i32
    %c0_i32_0 = arith.constant 0 : i32
    %c0_i32_1 = arith.constant 0 : i32
    return %c0_i32, %c0_i32_0 : i32, i32
  }
  func.func @transform_15(%arg0: i32) -> (i32, i32) {
    %c0_i32 = arith.constant 0 : i32
    %c0_i32_0 = arith.constant 0 : i32
    %c0_i32_1 = arith.constant 0 : i32
    return %c0_i32, %c0_i32_0 : i32, i32
  }
  func.func @transform_16(%arg0: i32) -> (i32, i32) {
    %c0_i32 = arith.constant 0 : i32
    %c0_i32_0 = arith.constant 0 : i32
    %c0_i32_1 = arith.constant 0 : i32
    return %c0_i32, %c0_i32_0 : i32, i32
  }
  func.func @transform_17(%arg0: i32) -> (i32, i32, i32) {
    %c0_i32 = arith.constant 0 : i32
    %c0_i32_0 = arith.constant 0 : i32
    %c0_i32_1 = arith.constant 0 : i32
    return %arg0, %c0_i32, %c0_i32_0 : i32, i32, i32
  }
}

</mosaic_0001>

<llo_original>
// kernel: tpu_custom_call.1
$region0: #{tpu_custom_call.1}
  #allocation0 [shape = 'u32[]', space=smem, size = 0x4, offset = 0x4, fixed_abs, tag = 'smem constant byte address 0x4 - core index']
  #allocation1 [shape = 'u32[144,128]{1,0:T(1,128)}', space=vmem, size = 0x12000, scoped, tag = 'internal scratch']
  %s0 = inlined_call_operand.hbm [shape: f32[2,16,192], index: 0, kind: input, shape index: {}]
  %s1 = inlined_call_operand.hbm [shape: bf16[192,128], index: 1, kind: input, shape index: {}]
  %s2 = inlined_call_operand.hbm [shape: f32[16,128], index: 2, kind: input, shape index: {}]
  %s3 = inlined_call_operand.hbm [shape: f32[1,128], index: 3, kind: input, shape index: {}]
  %s4 = inlined_call_operand.hbm [shape: f32[1,128], index: 4, kind: input, shape index: {}]
  %s5 = inlined_call_operand.hbm [shape: bf16[128,384], index: 5, kind: input, shape index: {}]
  %s6 = inlined_call_operand.hbm [shape: f32[1,384], index: 6, kind: input, shape index: {}]
  %s7 = inlined_call_operand.hbm [shape: bf16[4,32,128], index: 7, kind: input, shape index: {}]
  %s8 = inlined_call_operand.hbm [shape: f32[1,128], index: 8, kind: input, shape index: {}]
  %s9 = inlined_call_operand.hbm [shape: f32[1,128], index: 9, kind: input, shape index: {}]
  %s10 = inlined_call_operand.hbm [shape: f32[1,128], index: 10, kind: input, shape index: {}]
  %s11 = inlined_call_operand.hbm [shape: bf16[128,256], index: 11, kind: input, shape index: {}]
  %s12 = inlined_call_operand.hbm [shape: f32[1,256], index: 12, kind: input, shape index: {}]
  %s13 = inlined_call_operand.hbm [shape: bf16[256,128], index: 13, kind: input, shape index: {}]
  %s14 = inlined_call_operand.hbm [shape: f32[1,128], index: 14, kind: input, shape index: {}]
  %s15 = inlined_call_operand.hbm [shape: f32[1,128], index: 15, kind: input, shape index: {}]
  %s16 = inlined_call_operand.hbm [shape: f32[1,128], index: 16, kind: input, shape index: {}]
  %s17 = inlined_call_operand.hbm [shape: f32[2,16,128], index: 17, kind: output, shape index: {}]
  %s18 = sld [smem:[#allocation0]]
  $region169: #{tpu_custom_call.1} parent=0
    _
  %s20 = ssub.s32 1, %s18
  %s21 = scalar_select 0, %s20, %s18
  $region1: #{tpu_custom_call.1} parent=0
    #allocation2 [shape = 'u8[32768]{0}', space=vmem, size = 0x8000, scoped, tag = 'input window, operand 0']
    #allocation3 [shape = 's32[2]{0}', space=sflag, size = 0x8, scoped, tag = 'scoped memory for tpu_custom_call.1']
    #allocation4 [shape = 's32[2]{0}', space=sflag, size = 0x8, scoped, tag = 'scoped memory for tpu_custom_call.1']
    #allocation5 [shape = 'u8[49152]{0}', space=vmem, size = 0xc000, scoped, tag = 'input window, operand 1, single buffered']
    #allocation6 [shape = 's32[1]{0}', space=sflag, size = 0x4, scoped, tag = 'scoped memory for tpu_custom_call.1']
    #allocation7 [shape = 'u8[8192]{0}', space=vmem, size = 0x2000, scoped, tag = 'input window, operand 2, single buffered']
    #allocation8 [shape = 'u8[512]{0}', space=vmem, size = 0x400, scoped, tag = 'input window, operand 3, single buffered']
    #allocation9 [shape = 's32[1]{0}', space=sflag, size = 0x4, scoped, tag = 'scoped memory for tpu_custom_call.1']
    #allocation10 [shape = 'u8[512]{0}', space=vmem, size = 0x400, scoped, tag = 'input window, operand 4, single buffered']
    #allocation11 [shape = 'u8[98304]{0}', space=vmem, size = 0x18000, scoped, tag = 'input window, operand 5, single buffered']
    #allocation12 [shape = 's32[1]{0}', space=sflag, size = 0x4, scoped, tag = 'scoped memory for tpu_custom_call.1']
    #allocation13 [shape = 'u8[1536]{0}', space=vmem, size = 0x800, scoped, tag = 'input window, operand 6, single buffered']
    #allocation14 [shape = 'u8[32768]{0}', space=vmem, size = 0x8000, scoped, tag = 'input window, operand 7, single buffered']
    #allocation15 [shape = 's32[1]{0}', space=sflag, size = 0x4, scoped, tag = 'scoped memory for tpu_custom_call.1']
    #allocation16 [shape = 'u8[512]{0}', space=vmem, size = 0x400, scoped, tag = 'input window, operand 8, single buffered']
    #allocation17 [shape = 'u8[512]{0}', space=vmem, size = 0x400, scoped, tag = 'input window, operand 9, single buffered']
    #allocation18 [shape = 's32[1]{0}', space=sflag, size = 0x4, scoped, tag = 'scoped memory for tpu_custom_call.1']
    #allocation19 [shape = 'u8[512]{0}', space=vmem, size = 0x400, scoped, tag = 'input window, operand 10, single buffered']
    #allocation20 [shape = 'u8[65536]{0}', space=vmem, size = 0x10000, scoped, tag = 'input window, operand 11, single buffered']
    #allocation21 [shape = 's32[1]{0}', space=sflag, size = 0x4, scoped, tag = 'scoped memory for tpu_custom_call.1']
    #allocation22 [shape = 'u8[1024]{0}', space=vmem, size = 0x400, scoped, tag = 'input window, operand 12, single buffered']
    #allocation23 [shape = 'u8[65536]{0}', space=vmem, size = 0x10000, scoped, tag = 'input window, operand 13, single buffered']
    #allocation24 [shape = 's32[1]{0}', space=sflag, size = 0x4, scoped, tag = 'scoped memory for tpu_custom_call.1']
    #allocation25 [shape = 'u8[512]{0}', space=vmem, size = 0x400, scoped, tag = 'input window, operand 14, single buffered']
    #allocation26 [shape = 'u8[512]{0}', space=vmem, size = 0x400, scoped, tag = 'input window, operand 15, single buffered']
    #allocation27 [shape = 's32[1]{0}', space=sflag, size = 0x4, scoped, tag = 'scoped memory for tpu_custom_call.1']
    #allocation28 [shape = 'u8[512]{0}', space=vmem, size = 0x400, scoped, tag = 'input window, operand 16, single buffered']
    #allocation29 [shape = 'u8[16384]{0}', space=vmem, size = 0x4000, scoped, tag = 'output window, operand 0']
    %22 = vsyncpa [#allocation3], 0
    %s23 = scalar_lea.sflag [#allocation3], 1
    %24 = vsyncpa %s23, 0
    %25 = vsyncpa [#allocation6], 0
    %26 = vsyncpa [#allocation9], 0
    %27 = vsyncpa [#allocation12], 0
    %28 = vsyncpa [#allocation15], 0
    %29 = vsyncpa [#allocation18], 0
    %30 = vsyncpa [#allocation21], 0
    %31 = vsyncpa [#allocation24], 0
    %32 = vsyncpa [#allocation27], 0
    %33 = vsyncpa [#allocation4], 0
    %s34 = scalar_lea.sflag [#allocation4], 1
    %35 = vsyncpa %s34, 0
    loop: start=0, step=1, limit=4
    $region2: #{tpu_custom_call.1} parent=1 // loop_pre_header
      _
    $region3: #{tpu_custom_call.1} parent=1 // loop_header
      %s37 = sphi 0, %s41
      %p38 = scmp.ge.s32.totalorder %s37, 4
      %s47 = sphi 0, %s49
      %s50 = sphi 0, %s47
      %s51 = sphi 0, %s50
      %s67 = sphi 0, %s51
      %s71 = sphi 0, %s71
      %s73 = sphi 0, %s71
      %s74 = sphi 0, %s73
      %s88 = sphi 0, %s74
      %s92 = sphi 0, %s92
      %s94 = sphi 0, %s92
      %s95 = sphi 0, %s94
      %s109 = sphi 0, %s95
      %s113 = sphi 0, %s113
      %s115 = sphi 0, %s113
      %s116 = sphi 0, %s115
      %s130 = sphi 0, %s116
      %s134 = sphi 0, %s134
      %s136 = sphi 0, %s134
      %s137 = sphi 0, %s136
      %s151 = sphi 0, %s137
      %s155 = sphi 0, %s155
      %s157 = sphi 0, %s155
      %s158 = sphi 0, %s157
      %s172 = sphi 0, %s158
      %s176 = sphi 0, %s176
      %s178 = sphi 0, %s176
      %s179 = sphi 0, %s178
      %s193 = sphi 0, %s179
      %s197 = sphi 0, %s197
      %s199 = sphi 0, %s197
      %s200 = sphi 0, %s199
      %s214 = sphi 0, %s200
      %s218 = sphi 0, %s218
      %s220 = sphi 0, %s218
      %s221 = sphi 0, %s220
      %s235 = sphi 0, %s221
      %s239 = sphi 0, %s239
      %s241 = sphi 0, %s239
      %s242 = sphi 0, %s241
      %s256 = sphi 0, %s242
      %s260 = sphi 0, %s260
      %s262 = sphi 0, %s260
      %s263 = sphi 0, %s262
      %s277 = sphi 0, %s263
      %s281 = sphi 0, %s281
      %s283 = sphi 0, %s281
      %s284 = sphi 0, %s283
      %s298 = sphi 0, %s284
      %s302 = sphi 0, %s302
      %s304 = sphi 0, %s302
      %s305 = sphi 0, %s304
      %s319 = sphi 0, %s305
      %s323 = sphi 0, %s323
      %s325 = sphi 0, %s323
      %s326 = sphi 0, %s325
      %s340 = sphi 0, %s326
      %s344 = sphi 0, %s344
      %s346 = sphi 0, %s344
      %s347 = sphi 0, %s346
      %s361 = sphi 0, %s347
      %s365 = sphi 0, %s365
      %s367 = sphi 0, %s365
      %s368 = sphi 0, %s367
      %s382 = sphi 0, %s368
      %s386 = sphi 0, %s386
      %s388 = sphi 0, %s386
      %s389 = sphi 0, %s388
      %s403 = sphi 0, %s389
      %s409 = sphi 0, %s411
      %s412 = sphi 0, %s409
      %s413 = sphi 0, %s412
      %s429 = sphi 0, %s413
    $region4: #{tpu_custom_call.1} parent=1 // loop_header_branch
      %40 = sbr.rel (%p38) target = $region8
    $region5: #{tpu_custom_call.1} parent=1 // loop_body
      %s42 = ssub.s32 %s37, 1
      %s43 = ssub.s32 %s37, 2
      %s44 = sadd.s32 %s37, 1
      %s45 = ssub.s32 %s37, %s44
      %p46 = scmp.eq.s32.totalorder %s45, 0
      %s48 = sadd.s32 %s47, 1
      %s49 = scalar_select %p46, %s47, %s48
      %p52 = pneg %p46
      %p53 = scmp.eq.s32.totalorder %s37, 1
      %p54 = por %p52, %p53
      %p55 = scmp.ne.s32.totalorder %s47, %s50
      %p56 = scmp.eq.s32.totalorder %s37, 0
      %p57 = por %p55, %p56
      %p58 = scmp.ne.s32.totalorder %s47, %s50
      %p59 = scmp.eq.s32.totalorder %s42, 1
      %p60 = por %p58, %p59
      %p61 = scmp.ne.s32.totalorder %s50, %s51
      %p62 = scmp.eq.s32.totalorder %s42, 0
      %p63 = por %p61, %p62
      %p64 = scmp.ne.s32.totalorder %s50, %s51
      %p65 = scmp.eq.s32.totalorder %s43, 1
      %p66 = por %p64, %p65
      %p68 = scmp.ne.s32.totalorder %s51, %s67
      %p69 = scmp.eq.s32.totalorder %s43, 0
      %p70 = por %p68, %p69
      %s72 = sadd.s32 %s71, 1
      %p75 = scmp.eq.s32.totalorder %s37, 1
      %p76 = scmp.ne.s32.totalorder %s71, %s73
      %p77 = scmp.eq.s32.totalorder %s37, 0
      %p78 = por %p76, %p77
      %p79 = scmp.ne.s32.totalorder %s71, %s73
      %p80 = scmp.eq.s32.totalorder %s42, 1
      %p81 = por %p79, %p80
      %p82 = scmp.ne.s32.totalorder %s73, %s74
      %p83 = scmp.eq.s32.totalorder %s42, 0
      %p84 = por %p82, %p83
      %p85 = scmp.ne.s32.totalorder %s73, %s74
      %p86 = scmp.eq.s32.totalorder %s43, 1
      %p87 = por %p85, %p86
      %p89 = scmp.ne.s32.totalorder %s74, %s88
      %p90 = scmp.eq.s32.totalorder %s43, 0
      %p91 = por %p89, %p90
      %s93 = sadd.s32 %s92, 1
      %p96 = scmp.eq.s32.totalorder %s37, 1
      %p97 = scmp.ne.s32.totalorder %s92, %s94
      %p98 = scmp.eq.s32.totalorder %s37, 0
      %p99 = por %p97, %p98
      %p100 = scmp.ne.s32.totalorder %s92, %s94
      %p101 = scmp.eq.s32.totalorder %s42, 1
      %p102 = por %p100, %p101
      %p103 = scmp.ne.s32.totalorder %s94, %s95
      %p104 = scmp.eq.s32.totalorder %s42, 0
      %p105 = por %p103, %p104
      %p106 = scmp.ne.s32.totalorder %s94, %s95
      %p107 = scmp.eq.s32.totalorder %s43, 1
      %p108 = por %p106, %p107
      %p110 = scmp.ne.s32.totalorder %s95, %s109
      %p111 = scmp.eq.s32.totalorder %s43, 0
      %p112 = por %p110, %p111
      %s114 = sadd.s32 %s113, 1
      %p117 = scmp.eq.s32.totalorder %s37, 1
      %p118 = scmp.ne.s32.totalorder %s113, %s115
      %p119 = scmp.eq.s32.totalorder %s37, 0
      %p120 = por %p118, %p119
      %p121 = scmp.ne.s32.totalorder %s113, %s115
      %p122 = scmp.eq.s32.totalorder %s42, 1
      %p123 = por %p121, %p122
      %p124 = scmp.ne.s32.totalorder %s115, %s116
      %p125 = scmp.eq.s32.totalorder %s42, 0
      %p126 = por %p124, %p125
      %p127 = scmp.ne.s32.totalorder %s115, %s116
      %p128 = scmp.eq.s32.totalorder %s43, 1
      %p129 = por %p127, %p128
      %p131 = scmp.ne.s32.totalorder %s116, %s130
      %p132 = scmp.eq.s32.totalorder %s43, 0
      %p133 = por %p131, %p132
      %s135 = sadd.s32 %s134, 1
      %p138 = scmp.eq.s32.totalorder %s37, 1
      %p139 = scmp.ne.s32.totalorder %s134, %s136
      %p140 = scmp.eq.s32.totalorder %s37, 0
      %p141 = por %p139, %p140
      %p142 = scmp.ne.s32.totalorder %s134, %s136
      %p143 = scmp.eq.s32.totalorder %s42, 1
      %p144 = por %p142, %p143
      %p145 = scmp.ne.s32.totalorder %s136, %s137
      %p146 = scmp.eq.s32.totalorder %s42, 0
      %p147 = por %p145, %p146
      %p148 = scmp.ne.s32.totalorder %s136, %s137
      %p149 = scmp.eq.s32.totalorder %s43, 1
      %p150 = por %p148, %p149
      %p152 = scmp.ne.s32.totalorder %s137, %s151
      %p153 = scmp.eq.s32.totalorder %s43, 0
      %p154 = por %p152, %p153
      %s156 = sadd.s32 %s155, 1
      %p159 = scmp.eq.s32.totalorder %s37, 1
      %p160 = scmp.ne.s32.totalorder %s155, %s157
      %p161 = scmp.eq.s32.totalorder %s37, 0
      %p162 = por %p160, %p161
      %p163 = scmp.ne.s32.totalorder %s155, %s157
      %p164 = scmp.eq.s32.totalorder %s42, 1
      %p165 = por %p163, %p164
      %p166 = scmp.ne.s32.totalorder %s157, %s158
      %p167 = scmp.eq.s32.totalorder %s42, 0
      %p168 = por %p166, %p167
      %p169 = scmp.ne.s32.totalorder %s157, %s158
      %p170 = scmp.eq.s32.totalorder %s43, 1
      %p171 = por %p169, %p170
      %p173 = scmp.ne.s32.totalorder %s158, %s172
      %p174 = scmp.eq.s32.totalorder %s43, 0
      %p175 = por %p173, %p174
      %s177 = sadd.s32 %s176, 1
      %p180 = scmp.eq.s32.totalorder %s37, 1
      %p181 = scmp.ne.s32.totalorder %s176, %s178
      %p182 = scmp.eq.s32.totalorder %s37, 0
      %p183 = por %p181, %p182
      %p184 = scmp.ne.s32.totalorder %s176, %s178
      %p185 = scmp.eq.s32.totalorder %s42, 1
      %p186 = por %p184, %p185
      %p187 = scmp.ne.s32.totalorder %s178, %s179
      %p188 = scmp.eq.s32.totalorder %s42, 0
      %p189 = por %p187, %p188
      %p190 = scmp.ne.s32.totalorder %s178, %s179
      %p191 = scmp.eq.s32.totalorder %s43, 1
      %p192 = por %p190, %p191
      %p194 = scmp.ne.s32.totalorder %s179, %s193
      %p195 = scmp.eq.s32.totalorder %s43, 0
      %p196 = por %p194, %p195
      %s198 = sadd.s32 %s197, 1
      %p201 = scmp.eq.s32.totalorder %s37, 1
      %p202 = scmp.ne.s32.totalorder %s197, %s199
      %p203 = scmp.eq.s32.totalorder %s37, 0
      %p204 = por %p202, %p203
      %p205 = scmp.ne.s32.totalorder %s197, %s199
      %p206 = scmp.eq.s32.totalorder %s42, 1
      %p207 = por %p205, %p206
      %p208 = scmp.ne.s32.totalorder %s199, %s200
      %p209 = scmp.eq.s32.totalorder %s42, 0
      %p210 = por %p208, %p209
      %p211 = scmp.ne.s32.totalorder %s199, %s200
      %p212 = scmp.eq.s32.totalorder %s43, 1
      %p213 = por %p211, %p212
      %p215 = scmp.ne.s32.totalorder %s200, %s214
      %p216 = scmp.eq.s32.totalorder %s43, 0
      %p217 = por %p215, %p216
      %s219 = sadd.s32 %s218, 1
      %p222 = scmp.eq.s32.totalorder %s37, 1
      %p223 = scmp.ne.s32.totalorder %s218, %s220
      %p224 = scmp.eq.s32.totalorder %s37, 0
      %p225 = por %p223, %p224
      %p226 = scmp.ne.s32.totalorder %s218, %s220
      %p227 = scmp.eq.s32.totalorder %s42, 1
      %p228 = por %p226, %p227
      %p229 = scmp.ne.s32.totalorder %s220, %s221
      %p230 = scmp.eq.s32.totalorder %s42, 0
      %p231 = por %p229, %p230
      %p232 = scmp.ne.s32.totalorder %s220, %s221
      %p233 = scmp.eq.s32.totalorder %s43, 1
      %p234 = por %p232, %p233
      %p236 = scmp.ne.s32.totalorder %s221, %s235
      %p237 = scmp.eq.s32.totalorder %s43, 0
      %p238 = por %p236, %p237
      %s240 = sadd.s32 %s239, 1
      %p243 = scmp.eq.s32.totalorder %s37, 1
      %p244 = scmp.ne.s32.totalorder %s239, %s241
      %p245 = scmp.eq.s32.totalorder %s37, 0
      %p246 = por %p244, %p245
      %p247 = scmp.ne.s32.totalorder %s239, %s241
      %p248 = scmp.eq.s32.totalorder %s42, 1
      %p249 = por %p247, %p248
      %p250 = scmp.ne.s32.totalorder %s241, %s242
      %p251 = scmp.eq.s32.totalorder %s42, 0
      %p252 = por %p250, %p251
      %p253 = scmp.ne.s32.totalorder %s241, %s242
      %p254 = scmp.eq.s32.totalorder %s43, 1
      %p255 = por %p253, %p254
      %p257 = scmp.ne.s32.totalorder %s242, %s256
      %p258 = scmp.eq.s32.totalorder %s43, 0
      %p259 = por %p257, %p258
      %s261 = sadd.s32 %s260, 1
      %p264 = scmp.eq.s32.totalorder %s37, 1
      %p265 = scmp.ne.s32.totalorder %s260, %s262
      %p266 = scmp.eq.s32.totalorder %s37, 0
      %p267 = por %p265, %p266
      %p268 = scmp.ne.s32.totalorder %s260, %s262
      %p269 = scmp.eq.s32.totalorder %s42, 1
      %p270 = por %p268, %p269
      %p271 = scmp.ne.s32.totalorder %s262, %s263
      %p272 = scmp.eq.s32.totalorder %s42, 0
      %p273 = por %p271, %p272
      %p274 = scmp.ne.s32.totalorder %s262, %s263
      %p275 = scmp.eq.s32.totalorder %s43, 1
      %p276 = por %p274, %p275
      %p278 = scmp.ne.s32.totalorder %s263, %s277
      %p279 = scmp.eq.s32.totalorder %s43, 0
      %p280 = por %p278, %p279
      %s282 = sadd.s32 %s281, 1
      %p285 = scmp.eq.s32.totalorder %s37, 1
      %p286 = scmp.ne.s32.totalorder %s281, %s283
      %p287 = scmp.eq.s32.totalorder %s37, 0
      %p288 = por %p286, %p287
      %p289 = scmp.ne.s32.totalorder %s281, %s283
      %p290 = scmp.eq.s32.totalorder %s42, 1
      %p291 = por %p289, %p290
      %p292 = scmp.ne.s32.totalorder %s283, %s284
      %p293 = scmp.eq.s32.totalorder %s42, 0
      %p294 = por %p292, %p293
      %p295 = scmp.ne.s32.totalorder %s283, %s284
      %p296 = scmp.eq.s32.totalorder %s43, 1
      %p297 = por %p295, %p296
      %p299 = scmp.ne.s32.totalorder %s284, %s298
      %p300 = scmp.eq.s32.totalorder %s43, 0
      %p301 = por %p299, %p300
      %s303 = sadd.s32 %s302, 1
      %p306 = scmp.eq.s32.totalorder %s37, 1
      %p307 = scmp.ne.s32.totalorder %s302, %s304
      %p308 = scmp.eq.s32.totalorder %s37, 0
      %p309 = por %p307, %p308
      %p310 = scmp.ne.s32.totalorder %s302, %s304
      %p311 = scmp.eq.s32.totalorder %s42, 1
      %p312 = por %p310, %p311
      %p313 = scmp.ne.s32.totalorder %s304, %s305
      %p314 = scmp.eq.s32.totalorder %s42, 0
      %p315 = por %p313, %p314
      %p316 = scmp.ne.s32.totalorder %s304, %s305
      %p317 = scmp.eq.s32.totalorder %s43, 1
      %p318 = por %p316, %p317
      %p320 = scmp.ne.s32.totalorder %s305, %s319
      %p321 = scmp.eq.s32.totalorder %s43, 0
      %p322 = por %p320, %p321
      %s324 = sadd.s32 %s323, 1
      %p327 = scmp.eq.s32.totalorder %s37, 1
      %p328 = scmp.ne.s32.totalorder %s323, %s325
      %p329 = scmp.eq.s32.totalorder %s37, 0
      %p330 = por %p328, %p329
      %p331 = scmp.ne.s32.totalorder %s323, %s325
      %p332 = scmp.eq.s32.totalorder %s42, 1
      %p333 = por %p331, %p332
      %p334 = scmp.ne.s32.totalorder %s325, %s326
      %p335 = scmp.eq.s32.totalorder %s42, 0
      %p336 = por %p334, %p335
      %p337 = scmp.ne.s32.totalorder %s325, %s326
      %p338 = scmp.eq.s32.totalorder %s43, 1
      %p339 = por %p337, %p338
      %p341 = scmp.ne.s32.totalorder %s326, %s340
      %p342 = scmp.eq.s32.totalorder %s43, 0
      %p343 = por %p341, %p342
      %s345 = sadd.s32 %s344, 1
      %p348 = scmp.eq.s32.totalorder %s37, 1
      %p349 = scmp.ne.s32.totalorder %s344, %s346
      %p350 = scmp.eq.s32.totalorder %s37, 0
      %p351 = por %p349, %p350
      %p352 = scmp.ne.s32.totalorder %s344, %s346
      %p353 = scmp.eq.s32.totalorder %s42, 1
      %p354 = por %p352, %p353
      %p355 = scmp.ne.s32.totalorder %s346, %s347
      %p356 = scmp.eq.s32.totalorder %s42, 0
      %p357 = por %p355, %p356
      %p358 = scmp.ne.s32.totalorder %s346, %s347
      %p359 = scmp.eq.s32.totalorder %s43, 1
      %p360 = por %p358, %p359
      %p362 = scmp.ne.s32.totalorder %s347, %s361
      %p363 = scmp.eq.s32.totalorder %s43, 0
      %p364 = por %p362, %p363
      %s366 = sadd.s32 %s365, 1
      %p369 = scmp.eq.s32.totalorder %s37, 1
      %p370 = scmp.ne.s32.totalorder %s365, %s367
      %p371 = scmp.eq.s32.totalorder %s37, 0
      %p372 = por %p370, %p371
      %p373 = scmp.ne.s32.totalorder %s365, %s367
      %p374 = scmp.eq.s32.totalorder %s42, 1
      %p375 = por %p373, %p374
      %p376 = scmp.ne.s32.totalorder %s367, %s368
      %p377 = scmp.eq.s32.totalorder %s42, 0
      %p378 = por %p376, %p377
      %p379 = scmp.ne.s32.totalorder %s367, %s368
      %p380 = scmp.eq.s32.totalorder %s43, 1
      %p381 = por %p379, %p380
      %p383 = scmp.ne.s32.totalorder %s368, %s382
      %p384 = scmp.eq.s32.totalorder %s43, 0
      %p385 = por %p383, %p384
      %s387 = sadd.s32 %s386, 1
      %p390 = scmp.eq.s32.totalorder %s37, 1
      %p391 = scmp.ne.s32.totalorder %s386, %s388
      %p392 = scmp.eq.s32.totalorder %s37, 0
      %p393 = por %p391, %p392
      %p394 = scmp.ne.s32.totalorder %s386, %s388
      %p395 = scmp.eq.s32.totalorder %s42, 1
      %p396 = por %p394, %p395
      %p397 = scmp.ne.s32.totalorder %s388, %s389
      %p398 = scmp.eq.s32.totalorder %s42, 0
      %p399 = por %p397, %p398
      %p400 = scmp.ne.s32.totalorder %s388, %s389
      %p401 = scmp.eq.s32.totalorder %s43, 1
      %p402 = por %p400, %p401
      %p404 = scmp.ne.s32.totalorder %s389, %s403
      %p405 = scmp.eq.s32.totalorder %s43, 0
      %p406 = por %p404, %p405
      %s407 = ssub.s32 %s37, %s44
      %p408 = scmp.eq.s32.totalorder %s407, 0
      %s410 = sadd.s32 %s409, 1
      %s411 = scalar_select %p408, %s409, %s410
      %p414 = pneg %p408
      %p415 = scmp.eq.s32.totalorder %s37, 1
      %p416 = por %p414, %p415
      %p417 = scmp.ne.s32.totalorder %s409, %s412
      %p418 = scmp.eq.s32.totalorder %s37, 0
      %p419 = por %p417, %p418
      %p420 = scmp.ne.s32.totalorder %s409, %s412
      %p421 = scmp.eq.s32.totalorder %s42, 1
      %p422 = por %p420, %p421
      %p423 = scmp.ne.s32.totalorder %s412, %s413
      %p424 = scmp.eq.s32.totalorder %s42, 0
      %p425 = por %p423, %p424
      %p426 = scmp.ne.s32.totalorder %s412, %s413
      %p427 = scmp.eq.s32.totalorder %s43, 1
      %p428 = por %p426, %p427
      %p430 = scmp.ne.s32.totalorder %s413, %s429
      %p431 = scmp.eq.s32.totalorder %s43, 0
      %p432 = por %p430, %p431
      %p433 = scmp.le.s32.totalorder 1, %s37
      %p434 = scmp.lt.s32.totalorder %s37, 3
      %p435 = pnand %p433, %p434
      %p436 = pneg %p435
      // Predicated region
      $region9: #{tpu_custom_call.1} parent=5 // pred_check
        _
      $region10: #{tpu_custom_call.1} parent=5 // pred_check_branch
        %438 = sbr.rel (%p435) target = $region12
      $region11: #{tpu_custom_call.1} parent=5 // pred_region
        %s439 = ssub.s32 %s37, 1
        // Predicated region
        $region13: #{tpu_custom_call.1} parent=11 // pred_check
          %p440 = pneg %p84
        $region14: #{tpu_custom_call.1} parent=11 // pred_check_branch
          %442 = sbr.rel (%p440) target = $region16
        $region15: #{tpu_custom_call.1} parent=11 // pred_region
          %s444 = ssub.s32 1536, 1536
          %445 = vsyncadd [#allocation6], %s444
          %s446 = sshll.u32 [#allocation5], 4
          %s447 = int_to_ptr.vmem [resolvable:$true] %s446
          %452 = dma.hbm_to_vmem [thread:$0]  %s1, 1536, %s447, [#allocation6], 64, 64, 4
        $region16: #{tpu_custom_call.1} parent=11 // pred_fallthru
          _
        // Predicated region
        $region17: #{tpu_custom_call.1} parent=11 // pred_check
          %p453 = pneg %p105
        $region18: #{tpu_custom_call.1} parent=11 // pred_check_branch
          %455 = sbr.rel (%p453) target = $region20
        $region19: #{tpu_custom_call.1} parent=11 // pred_region
          %s457 = ssub.s32 256, 256
          %458 = vsyncadd [#allocation6], %s457
          %s459 = sshll.u32 [#allocation7], 4
          %s460 = int_to_ptr.vmem [resolvable:$true] %s459
          %465 = dma.hbm_to_vmem [thread:$0]  %s2, 256, %s460, [#allocation6], 128, 128, 8
        $region20: #{tpu_custom_call.1} parent=11 // pred_fallthru
          _
        // Predicated region
        $region21: #{tpu_custom_call.1} parent=11 // pred_check
          %p466 = pneg %p126
        $region22: #{tpu_custom_call.1} parent=11 // pred_check_branch
          %468 = sbr.rel (%p466) target = $region24
        $region23: #{tpu_custom_call.1} parent=11 // pred_region
          %s470 = ssub.s32 16, 16
          %471 = vsyncadd [#allocation9], %s470
          %s473 = sshll.u32 [#allocation8], 4
          %s474 = int_to_ptr.vmem [resolvable:$true] %s473
          %476 = dma.hbm_to_vmem [thread:$0]  %s3, 16, %s474, [#allocation9]
        $region24: #{tpu_custom_call.1} parent=11 // pred_fallthru
          _
        // Predicated region
        $region25: #{tpu_custom_call.1} parent=11 // pred_check
          %p477 = pneg %p147
        $region26: #{tpu_custom_call.1} parent=11 // pred_check_branch
          %479 = sbr.rel (%p477) target = $region28
        $region27: #{tpu_custom_call.1} parent=11 // pred_region
          %s481 = ssub.s32 16, 16
          %482 = vsyncadd [#allocation9], %s481
          %s484 = sshll.u32 [#allocation10], 4
          %s485 = int_to_ptr.vmem [resolvable:$true] %s484
          %487 = dma.hbm_to_vmem [thread:$0]  %s4, 16, %s485, [#allocation9]
        $region28: #{tpu_custom_call.1} parent=11 // pred_fallthru
          _
        // Predicated region
        $region29: #{tpu_custom_call.1} parent=11 // pred_check
          %p488 = pneg %p168
        $region30: #{tpu_custom_call.1} parent=11 // pred_check_branch
          %490 = sbr.rel (%p488) target = $region32
        $region31: #{tpu_custom_call.1} parent=11 // pred_region
          %s492 = ssub.s32 3072, 3072
          %493 = vsyncadd [#allocation12], %s492
          %s494 = sshll.u32 [#allocation11], 4
          %s495 = int_to_ptr.vmem [resolvable:$true] %s494
          %500 = dma.hbm_to_vmem [thread:$0]  %s5, 3072, %s495, [#allocation12], 192, 192, 12
        $region32: #{tpu_custom_call.1} parent=11 // pred_fallthru
          _
        // Predicated region
        $region33: #{tpu_custom_call.1} parent=11 // pred_check
          %p501 = pneg %p189
        $region34: #{tpu_custom_call.1} parent=11 // pred_check_branch
          %503 = sbr.rel (%p501) target = $region36
        $region35: #{tpu_custom_call.1} parent=11 // pred_region
          %s505 = ssub.s32 48, 48
          %506 = vsyncadd [#allocation12], %s505
          %s508 = sshll.u32 [#allocation13], 4
          %s509 = int_to_ptr.vmem [resolvable:$true] %s508
          %511 = dma.hbm_to_vmem [thread:$0]  %s6, 48, %s509, [#allocation12]
        $region36: #{tpu_custom_call.1} parent=11 // pred_fallthru
          _
        // Predicated region
        $region37: #{tpu_custom_call.1} parent=11 // pred_check
          %p512 = pneg %p210
        $region38: #{tpu_custom_call.1} parent=11 // pred_check_branch
          %514 = sbr.rel (%p512) target = $region40
        $region39: #{tpu_custom_call.1} parent=11 // pred_region
          %s516 = ssub.s32 1024, 1024
          %517 = vsyncadd [#allocation15], %s516
          %s518 = sshll.u32 [#allocation14], 4
          %s519 = int_to_ptr.vmem [resolvable:$true] %s518
          %524 = dma.hbm_to_vmem [thread:$0]  %s7, 1024, %s519, [#allocation15], 64, 64, 4
        $region40: #{tpu_custom_call.1} parent=11 // pred_fallthru
          _
        // Predicated region
        $region41: #{tpu_custom_call.1} parent=11 // pred_check
          %p525 = pneg %p231
        $region42: #{tpu_custom_call.1} parent=11 // pred_check_branch
          %527 = sbr.rel (%p525) target = $region44
        $region43: #{tpu_custom_call.1} parent=11 // pred_region
          %s529 = ssub.s32 16, 16
          %530 = vsyncadd [#allocation15], %s529
          %s532 = sshll.u32 [#allocation16], 4
          %s533 = int_to_ptr.vmem [resolvable:$true] %s532
          %535 = dma.hbm_to_vmem [thread:$0]  %s8, 16, %s533, [#allocation15]
        $region44: #{tpu_custom_call.1} parent=11 // pred_fallthru
          _
        // Predicated region
        $region45: #{tpu_custom_call.1} parent=11 // pred_check
          %p536 = pneg %p252
        $region46: #{tpu_custom_call.1} parent=11 // pred_check_branch
          %538 = sbr.rel (%p536) target = $region48
        $region47: #{tpu_custom_call.1} parent=11 // pred_region
          %s540 = ssub.s32 16, 16
          %541 = vsyncadd [#allocation18], %s540
          %s543 = sshll.u32 [#allocation17], 4
          %s544 = int_to_ptr.vmem [resolvable:$true] %s543
          %546 = dma.hbm_to_vmem [thread:$0]  %s9, 16, %s544, [#allocation18]
        $region48: #{tpu_custom_call.1} parent=11 // pred_fallthru
          _
        // Predicated region
        $region49: #{tpu_custom_call.1} parent=11 // pred_check
          %p547 = pneg %p273
        $region50: #{tpu_custom_call.1} parent=11 // pred_check_branch
          %549 = sbr.rel (%p547) target = $region52
        $region51: #{tpu_custom_call.1} parent=11 // pred_region
          %s551 = ssub.s32 16, 16
          %552 = vsyncadd [#allocation18], %s551
          %s554 = sshll.u32 [#allocation19], 4
          %s555 = int_to_ptr.vmem [resolvable:$true] %s554
          %557 = dma.hbm_to_vmem [thread:$0]  %s10, 16, %s555, [#allocation18]
        $region52: #{tpu_custom_call.1} parent=11 // pred_fallthru
          _
        // Predicated region
        $region53: #{tpu_custom_call.1} parent=11 // pred_check
          %p558 = pneg %p294
        $region54: #{tpu_custom_call.1} parent=11 // pred_check_branch
          %560 = sbr.rel (%p558) target = $region56
        $region55: #{tpu_custom_call.1} parent=11 // pred_region
          %s562 = ssub.s32 2048, 2048
          %563 = vsyncadd [#allocation21], %s562
          %s564 = sshll.u32 [#allocation20], 4
          %s565 = int_to_ptr.vmem [resolvable:$true] %s564
          %570 = dma.hbm_to_vmem [thread:$0]  %s11, 2048, %s565, [#allocation21], 128, 128, 8
        $region56: #{tpu_custom_call.1} parent=11 // pred_fallthru
          _
        // Predicated region
        $region57: #{tpu_custom_call.1} parent=11 // pred_check
          %p571 = pneg %p315
        $region58: #{tpu_custom_call.1} parent=11 // pred_check_branch
          %573 = sbr.rel (%p571) target = $region60
        $region59: #{tpu_custom_call.1} parent=11 // pred_region
          %s575 = ssub.s32 32, 32
          %576 = vsyncadd [#allocation21], %s575
          %s578 = sshll.u32 [#allocation22], 4
          %s579 = int_to_ptr.vmem [resolvable:$true] %s578
          %581 = dma.hbm_to_vmem [thread:$0]  %s12, 32, %s579, [#allocation21]
        $region60: #{tpu_custom_call.1} parent=11 // pred_fallthru
          _
        // Predicated region
        $region61: #{tpu_custom_call.1} parent=11 // pred_check
          %p582 = pneg %p336
        $region62: #{tpu_custom_call.1} parent=11 // pred_check_branch
          %584 = sbr.rel (%p582) target = $region64
        $region63: #{tpu_custom_call.1} parent=11 // pred_region
          %s586 = ssub.s32 2048, 2048
          %587 = vsyncadd [#allocation24], %s586
          %s588 = sshll.u32 [#allocation23], 4
          %s589 = int_to_ptr.vmem [resolvable:$true] %s588
          %594 = dma.hbm_to_vmem [thread:$0]  %s13, 2048, %s589, [#allocation24], 64, 64, 4
        $region64: #{tpu_custom_call.1} parent=11 // pred_fallthru
          _
        // Predicated region
        $region65: #{tpu_custom_call.1} parent=11 // pred_check
          %p595 = pneg %p357
        $region66: #{tpu_custom_call.1} parent=11 // pred_check_branch
          %597 = sbr.rel (%p595) target = $region68
        $region67: #{tpu_custom_call.1} parent=11 // pred_region
          %s599 = ssub.s32 16, 16
          %600 = vsyncadd [#allocation24], %s599
          %s602 = sshll.u32 [#allocation25], 4
          %s603 = int_to_ptr.vmem [resolvable:$true] %s602
          %605 = dma.hbm_to_vmem [thread:$0]  %s14, 16, %s603, [#allocation24]
        $region68: #{tpu_custom_call.1} parent=11 // pred_fallthru
          _
        // Predicated region
        $region69: #{tpu_custom_call.1} parent=11 // pred_check
          %p606 = pneg %p378
        $region70: #{tpu_custom_call.1} parent=11 // pred_check_branch
          %608 = sbr.rel (%p606) target = $region72
        $region71: #{tpu_custom_call.1} parent=11 // pred_region
          %s610 = ssub.s32 16, 16
          %611 = vsyncadd [#allocation27], %s610
          %s613 = sshll.u32 [#allocation26], 4
          %s614 = int_to_ptr.vmem [resolvable:$true] %s613
          %616 = dma.hbm_to_vmem [thread:$0]  %s15, 16, %s614, [#allocation27]
        $region72: #{tpu_custom_call.1} parent=11 // pred_fallthru
          _
        // Predicated region
        $region73: #{tpu_custom_call.1} parent=11 // pred_check
          %p617 = pneg %p399
        $region74: #{tpu_custom_call.1} parent=11 // pred_check_branch
          %619 = sbr.rel (%p617) target = $region76
        $region75: #{tpu_custom_call.1} parent=11 // pred_region
          %s621 = ssub.s32 16, 16
          %622 = vsyncadd [#allocation27], %s621
          %s624 = sshll.u32 [#allocation28], 4
          %s625 = int_to_ptr.vmem [resolvable:$true] %s624
          %627 = dma.hbm_to_vmem [thread:$0]  %s16, 16, %s625, [#allocation27]
        $region76: #{tpu_custom_call.1} parent=11 // pred_fallthru
          _
      $region12: #{tpu_custom_call.1} parent=5 // pred_fallthru
        _
      %p628 = scmp.lt.s32.totalorder %s37, 2
      // Predicated region
      $region77: #{tpu_custom_call.1} parent=5 // pred_check
        %p629 = pneg %p628
      $region78: #{tpu_custom_call.1} parent=5 // pred_check_branch
        %631 = sbr.rel (%p629) target = $region80
      $region79: #{tpu_custom_call.1} parent=5 // pred_region
        // Predicated region
        $region81: #{tpu_custom_call.1} parent=79 // pred_check
          %p632 = pneg %p57
        $region82: #{tpu_custom_call.1} parent=79 // pred_check_branch
          %634 = sbr.rel (%p632) target = $region84
        $region83: #{tpu_custom_call.1} parent=79 // pred_region
          %s635 = sand.u32 %s47, 1
          %s636 = scalar_lea.sflag [#allocation3], %s635
          %s637 = sand.u32 %s47, 1
          %s638 = smul.addr %s637, 32
          %s639 = scalar_lea.vmem [#allocation2], %s638
          %s641 = ssub.s32 512, 512
          %642 = vsyncadd %s636, %s641
          %s643 = smul.addr %s37, 4
          %s644 = smul.addr %s643, 128
          %s645 = scalar_lea.hbm %s0, %s644
          %s646 = sshll.u32 %s639, 4
          %s647 = int_to_ptr.vmem [resolvable:$true] %s646
          %652 = dma.hbm_to_vmem [thread:$0]  %s645, 512, %s647, %s636, 256, 256, 16
        $region84: #{tpu_custom_call.1} parent=79 // pred_fallthru
          _
      $region80: #{tpu_custom_call.1} parent=5 // pred_fallthru
        _
      %p653 = scmp.le.s32.totalorder 1, %s37
      %p654 = scmp.lt.s32.totalorder %s37, 3
      %p655 = pnand %p653, %p654
      %p656 = pneg %p655
      // Predicated region
      $region85: #{tpu_custom_call.1} parent=5 // pred_check
        _
      $region86: #{tpu_custom_call.1} parent=5 // pred_check_branch
        %658 = sbr.rel (%p655) target = $region88
      $region87: #{tpu_custom_call.1} parent=5 // pred_region
        %s659 = ssub.s32 %s37, 1
        %s660 = sand.u32 %s50, 1
        %s661 = scalar_lea.sflag [#allocation3], %s660
        %s662 = sand.u32 %s50, 1
        %s663 = smul.addr %s662, 32
        %s664 = scalar_lea.vmem [#allocation2], %s663
        // Predicated region
        $region89: #{tpu_custom_call.1} parent=87 // pred_check
          %p665 = pneg %p63
        $region90: #{tpu_custom_call.1} parent=87 // pred_check_branch
          %667 = sbr.rel (%p665) target = $region92
        $region91: #{tpu_custom_call.1} parent=87 // pred_region
          %668 = dma.done %s661, 512
        $region92: #{tpu_custom_call.1} parent=87 // pred_fallthru
          _
        // Predicated region
        $region93: #{tpu_custom_call.1} parent=87 // pred_check
          %p669 = pneg %p84
        $region94: #{tpu_custom_call.1} parent=87 // pred_check_branch
          %671 = sbr.rel (%p669) target = $region96
        $region95: #{tpu_custom_call.1} parent=87 // pred_region
          %672 = dma.done [#allocation6], 1536
        $region96: #{tpu_custom_call.1} parent=87 // pred_fallthru
          _
        // Predicated region
        $region97: #{tpu_custom_call.1} parent=87 // pred_check
          %p673 = pneg %p105
        $region98: #{tpu_custom_call.1} parent=87 // pred_check_branch
          %675 = sbr.rel (%p673) target = $region100
        $region99: #{tpu_custom_call.1} parent=87 // pred_region
          %676 = dma.done [#allocation6], 256
        $region100: #{tpu_custom_call.1} parent=87 // pred_fallthru
          _
        // Predicated region
        $region101: #{tpu_custom_call.1} parent=87 // pred_check
          %p677 = pneg %p126
        $region102: #{tpu_custom_call.1} parent=87 // pred_check_branch
          %679 = sbr.rel (%p677) target = $region104
        $region103: #{tpu_custom_call.1} parent=87 // pred_region
          %680 = dma.done [#allocation9], 16
        $region104: #{tpu_custom_call.1} parent=87 // pred_fallthru
          _
        // Predicated region
        $region105: #{tpu_custom_call.1} parent=87 // pred_check
          %p681 = pneg %p147
        $region106: #{tpu_custom_call.1} parent=87 // pred_check_branch
          %683 = sbr.rel (%p681) target = $region108
        $region107: #{tpu_custom_call.1} parent=87 // pred_region
          %684 = dma.done [#allocation9], 16
        $region108: #{tpu_custom_call.1} parent=87 // pred_fallthru
          _
        // Predicated region
        $region109: #{tpu_custom_call.1} parent=87 // pred_check
          %p685 = pneg %p168
        $region110: #{tpu_custom_call.1} parent=87 // pred_check_branch
          %687 = sbr.rel (%p685) target = $region112
        $region111: #{tpu_custom_call.1} parent=87 // pred_region
          %688 = dma.done [#allocation12], 3072
        $region112: #{tpu_custom_call.1} parent=87 // pred_fallthru
          _
        // Predicated region
        $region113: #{tpu_custom_call.1} parent=87 // pred_check
          %p689 = pneg %p189
        $region114: #{tpu_custom_call.1} parent=87 // pred_check_branch
          %691 = sbr.rel (%p689) target = $region116
        $region115: #{tpu_custom_call.1} parent=87 // pred_region
          %692 = dma.done [#allocation12], 48
        $region116: #{tpu_custom_call.1} parent=87 // pred_fallthru
          _
        // Predicated region
        $region117: #{tpu_custom_call.1} parent=87 // pred_check
          %p693 = pneg %p210
        $region118: #{tpu_custom_call.1} parent=87 // pred_check_branch
          %695 = sbr.rel (%p693) target = $region120
        $region119: #{tpu_custom_call.1} parent=87 // pred_region
          %696 = dma.done [#allocation15], 1024
        $region120: #{tpu_custom_call.1} parent=87 // pred_fallthru
          _
        // Predicated region
        $region121: #{tpu_custom_call.1} parent=87 // pred_check
          %p697 = pneg %p231
        $region122: #{tpu_custom_call.1} parent=87 // pred_check_branch
          %699 = sbr.rel (%p697) target = $region124
        $region123: #{tpu_custom_call.1} parent=87 // pred_region
          %700 = dma.done [#allocation15], 16
        $region124: #{tpu_custom_call.1} parent=87 // pred_fallthru
          _
        // Predicated region
        $region125: #{tpu_custom_call.1} parent=87 // pred_check
          %p701 = pneg %p252
        $region126: #{tpu_custom_call.1} parent=87 // pred_check_branch
          %703 = sbr.rel (%p701) target = $region128
        $region127: #{tpu_custom_call.1} parent=87 // pred_region
          %704 = dma.done [#allocation18], 16
        $region128: #{tpu_custom_call.1} parent=87 // pred_fallthru
          _
        // Predicated region
        $region129: #{tpu_custom_call.1} parent=87 // pred_check
          %p705 = pneg %p273
        $region130: #{tpu_custom_call.1} parent=87 // pred_check_branch
          %707 = sbr.rel (%p705) target = $region132
        $region131: #{tpu_custom_call.1} parent=87 // pred_region
          %708 = dma.done [#allocation18], 16
        $region132: #{tpu_custom_call.1} parent=87 // pred_fallthru
          _
        // Predicated region
        $region133: #{tpu_custom_call.1} parent=87 // pred_check
          %p709 = pneg %p294
        $region134: #{tpu_custom_call.1} parent=87 // pred_check_branch
          %711 = sbr.rel (%p709) target = $region136
        $region135: #{tpu_custom_call.1} parent=87 // pred_region
          %712 = dma.done [#allocation21], 2048
        $region136: #{tpu_custom_call.1} parent=87 // pred_fallthru
          _
        // Predicated region
        $region137: #{tpu_custom_call.1} parent=87 // pred_check
          %p713 = pneg %p315
        $region138: #{tpu_custom_call.1} parent=87 // pred_check_branch
          %715 = sbr.rel (%p713) target = $region140
        $region139: #{tpu_custom_call.1} parent=87 // pred_region
          %716 = dma.done [#allocation21], 32
        $region140: #{tpu_custom_call.1} parent=87 // pred_fallthru
          _
        // Predicated region
        $region141: #{tpu_custom_call.1} parent=87 // pred_check
          %p717 = pneg %p336
        $region142: #{tpu_custom_call.1} parent=87 // pred_check_branch
          %719 = sbr.rel (%p717) target = $region144
        $region143: #{tpu_custom_call.1} parent=87 // pred_region
          %720 = dma.done [#allocation24], 2048
        $region144: #{tpu_custom_call.1} parent=87 // pred_fallthru
          _
        // Predicated region
        $region145: #{tpu_custom_call.1} parent=87 // pred_check
          %p721 = pneg %p357
        $region146: #{tpu_custom_call.1} parent=87 // pred_check_branch
          %723 = sbr.rel (%p721) target = $region148
        $region147: #{tpu_custom_call.1} parent=87 // pred_region
          %724 = dma.done [#allocation24], 16
        $region148: #{tpu_custom_call.1} parent=87 // pred_fallthru
          _
        // Predicated region
        $region149: #{tpu_custom_call.1} parent=87 // pred_check
          %p725 = pneg %p378
        $region150: #{tpu_custom_call.1} parent=87 // pred_check_branch
          %727 = sbr.rel (%p725) target = $region152
        $region151: #{tpu_custom_call.1} parent=87 // pred_region
          %728 = dma.done [#allocation27], 16
        $region152: #{tpu_custom_call.1} parent=87 // pred_fallthru
          _
        // Predicated region
        $region153: #{tpu_custom_call.1} parent=87 // pred_check
          %p729 = pneg %p399
        $region154: #{tpu_custom_call.1} parent=87 // pred_check_branch
          %731 = sbr.rel (%p729) target = $region156
        $region155: #{tpu_custom_call.1} parent=87 // pred_region
          %732 = dma.done [#allocation27], 16
        $region156: #{tpu_custom_call.1} parent=87 // pred_fallthru
          _
        %s733 = sand.u32 %s50, 1
        %s734 = scalar_lea.sflag [#allocation3], %s733
        %s735 = sand.u32 %s50, 1
        %s736 = smul.addr %s735, 32
        %s737 = scalar_lea.vmem [#allocation2], %s736
        %p738 = pneg %p63
        %p739 = pneg %p60
        %p740 = pneg %p84
        %p741 = pneg %p81
        %p742 = pneg %p105
        %p743 = pneg %p102
        %p744 = pneg %p126
        %p745 = pneg %p123
        %p746 = pneg %p147
        %p747 = pneg %p144
        %p748 = pneg %p168
        %p749 = pneg %p165
        %p750 = pneg %p189
        %p751 = pneg %p186
        %p752 = pneg %p210
        %p753 = pneg %p207
        %p754 = pneg %p231
        %p755 = pneg %p228
        %p756 = pneg %p252
        %p757 = pneg %p249
        %p758 = pneg %p273
        %p759 = pneg %p270
        %p760 = pneg %p294
        %p761 = pneg %p291
        %p762 = pneg %p315
        %p763 = pneg %p312
        %p764 = pneg %p336
        %p765 = pneg %p333
        %p766 = pneg %p357
        %p767 = pneg %p354
        %p768 = pneg %p378
        %p769 = pneg %p375
        %p770 = pneg %p399
        %p771 = pneg %p396
        %p772 = pneg %p425
        %p773 = pneg %p422
        %s774 = sand.u32 %s412, 1
        %s775 = scalar_lea.sflag [#allocation4], %s774
        %s776 = sand.u32 %s412, 1
        %s777 = smul.addr %s776, 16
        %s778 = scalar_lea.vmem [#allocation29], %s777
        %v780 = vld [vmem:[%s664] sm:$0xff]
        %v781 = vld [vmem:[%s664 + $0x8] sm:$0xff]
        %v782 = vld [vmem:[%s664 + $0x10] sm:$0xff]
        %v783 = vld [vmem:[%s664 + $0x18] sm:$0xff]
        %v784 = vpack.c.bf16 %v782, %v780
        %v785 = vpack.c.bf16 %v783, %v781
        %v786 = vld [vmem:[#allocation5] sm:$0xf]
        %v787 = vld [vmem:[#allocation5 + $0x4] sm:$0xf]
        %v788 = vld [vmem:[#allocation5 + $0x8] sm:$0xf]
        %v789 = vld [vmem:[#allocation5 + $0xc] sm:$0xf]
        %v790 = vld [vmem:[#allocation5 + $0x10] sm:$0xf]
        %v791 = vld [vmem:[#allocation5 + $0x14] sm:$0xf]
        %v792 = vld [vmem:[#allocation5 + $0x18] sm:$0xf]
        %v793 = vld [vmem:[#allocation5 + $0x1c] sm:$0xf]
        %v794 = vld [vmem:[#allocation5 + $0x20] sm:$0xf]
        %v795 = vld [vmem:[#allocation5 + $0x24] sm:$0xf]
        %v796 = vld [vmem:[#allocation5 + $0x28] sm:$0xf]
        %v797 = vld [vmem:[#allocation5 + $0x2c] sm:$0xf]
        %v798 = vld [vmem:[#allocation5 + $0x30] sm:$0xf]
        %v799 = vld [vmem:[#allocation5 + $0x34] sm:$0xf]
        %v800 = vld [vmem:[#allocation5 + $0x38] sm:$0xf]
        %v801 = vld [vmem:[#allocation5 + $0x3c] sm:$0xf]
        %v802 = vld [vmem:[#allocation5 + $0x40] sm:$0xf]
        %v803 = vld [vmem:[#allocation5 + $0x44] sm:$0xf]
        %v804 = vld [vmem:[#allocation5 + $0x48] sm:$0xf]
        %v805 = vld [vmem:[#allocation5 + $0x4c] sm:$0xf]
        %v806 = vld [vmem:[#allocation5 + $0x50] sm:$0xf]
        %v807 = vld [vmem:[#allocation5 + $0x54] sm:$0xf]
        %v808 = vld [vmem:[#allocation5 + $0x58] sm:$0xf]
        %v809 = vld [vmem:[#allocation5 + $0x5c] sm:$0xf]
        %v810 = vld [vmem:[#allocation7] sm:$0xff]
        %v811 = vld [vmem:[#allocation7 + $0x8] sm:$0xff]
        %v836 = vunpack.c.l.b16 %v786
        %v837 = vunpack.c.l.b16 %v787
        %v838 = vunpack.c.l.b16 %v788
        %v839 = vunpack.c.l.b16 %v789
        %v840 = vunpack.c.l.b16 %v790
        %v841 = vunpack.c.l.b16 %v791
        %v842 = vunpack.c.l.b16 %v792
        %v843 = vunpack.c.l.b16 %v793
        %v844 = vunpack.c.l.b16 %v794
        %v845 = vunpack.c.l.b16 %v795
        %v846 = vunpack.c.l.b16 %v796
        %v847 = vunpack.c.l.b16 %v797
        %v848 = vunpack.c.l.b16 %v798
        %v849 = vunpack.c.l.b16 %v799
        %v850 = vunpack.c.l.b16 %v800
        %v851 = vunpack.c.l.b16 %v801
        %v852 = vunpack.c.l.b16 %v802
        %v853 = vunpack.c.l.b16 %v803
        %v854 = vunpack.c.l.b16 %v804
        %v855 = vunpack.c.l.b16 %v805
        %v856 = vunpack.c.l.b16 %v806
        %v857 = vunpack.c.l.b16 %v807
        %v858 = vunpack.c.l.b16 %v808
        %v859 = vunpack.c.l.b16 %v809
        %v860 = vpack.c.b16 %v837, %v836
        %v861 = vpack.c.b16 %v839, %v838
        %v862 = vpack.c.b16 %v841, %v840
        %v863 = vpack.c.b16 %v843, %v842
        %v864 = vpack.c.b16 %v845, %v844
        %v865 = vpack.c.b16 %v847, %v846
        %v866 = vpack.c.b16 %v849, %v848
        %v867 = vpack.c.b16 %v851, %v850
        %v868 = vpack.c.b16 %v853, %v852
        %v869 = vpack.c.b16 %v855, %v854
        %v870 = vpack.c.b16 %v857, %v856
        %v871 = vpack.c.b16 %v859, %v858
        %vm884 = vcmask 523264
        %v886 = vsel %vm884, %v785, 0
        %888 = vmatprep.subr.bf16.mxu0 0
        %889 = vmatpush1.bf16.msra.mxu0 %v860
        %890 = vmatprep.subr.bf16.mxu0 0
        %891 = vmatpush1.bf16.msra.mxu0 %v861
        %892 = vmatprep.subr.bf16.mxu0 0
        %893 = vmatpush1.bf16.msra.mxu0 %v862
        %894 = vmatprep.subr.bf16.mxu0 0
        %895 = vmatpush1.bf16.msra.mxu0 %v863
        %896 = vmatprep.subr.bf16.mxu0 0
        %897 = vmatpush1.bf16.msra.mxu0 %v864
        %898 = vmatprep.subr.bf16.mxu0 0
        %899 = vmatpush1.bf16.msra.mxu0 %v865
        %900 = vmatprep.subr.bf16.mxu0 0
        %901 = vmatpush1.bf16.msra.mxu0 %v866
        %902 = vmatprep.subr.bf16.mxu0 0
        %903 = vmatpush1.bf16.msra.mxu0 %v867
        %904 = vmatprep.subr.bf16.mxu0 0
        %905 = vmatpush1.bf16.msra.mxu0 %v868
        %906 = vmatprep.subr.bf16.mxu0 0
        %907 = vmatpush1.bf16.msra.mxu0 %v869
        %908 = vmatprep.subr.bf16.mxu0 0
        %909 = vmatpush1.bf16.msra.mxu0 %v870
        %910 = vmatprep.subr.bf16.mxu0 0
        %911 = vmatpush1.bf16.msra.mxu0 %v871
        %912 = vmatprep.subr.bf16.mxu0 0
        %913 = vmatpush1.bf16.msra.mxu0 0
        %914 = vmatprep.subr.bf16.mxu0 0
        %915 = vmatpush1.bf16.msra.mxu0 0
        %916 = vmatprep.subr.bf16.mxu0 0
        %917 = vmatpush1.bf16.msra.mxu0 0
        %918 = vmatprep.subr.bf16.mxu0 0
        %919 = vmatpush1.bf16.msra.mxu0 0
        %920 = vmatprep.mubr.bf16.mxu0 %v886
        %921 = vmatmul.mubr.bf16.gmra.mrb[0].mxu0 %v784
        %v922 = vpop.f32.mrb[0].mxu0
        %v923 = vadd.f32 %v810, %v922
        %v924 = vpop.f32.mrb[0].mxu0
        %v925 = vpop.f32.mrb[0].mxu0
        %v926 = vadd.f32 %v811, %v925
        %v927 = vpop.f32.mrb[0].mxu0
        %928 = vdwg.mxu0
        %v929 = vld [vmem:[#allocation8] sm:$0x1]
        %v930 = vld [vmem:[#allocation10] sm:$0x1]
        %931 = vadd.xlane.f32.xlu0 %v923
        %v932 = vpop.xlane.xlu0 %931
        %933 = vadd.xlane.f32.xlu0 %v926
        %v934 = vpop.xlane.xlu0 %933
        %v935 = vrcp.pop 128.0
        %v936 = vmul.f32 %v932, %v935
        %v937 = vmul.f32 %v934, %v935
        %v938 = vsub.f32 %v923, %v936
        %v939 = vsub.f32 %v926, %v937
        %v940 = vmul.f32 %v938, %v938
        %v941 = vmul.f32 %v939, %v939
        %942 = vadd.xlane.f32.xlu0 %v940
        %v943 = vpop.xlane.xlu0 %942
        %944 = vadd.xlane.f32.xlu0 %v941
        %v945 = vpop.xlane.xlu0 %944
        %v946 = vmul.f32 %v943, %v935
        %v947 = vmul.f32 %v945, %v935
        %v948 = vadd.f32 %v946, 1e-06
        %v949 = vadd.f32 %v947, 1e-06
        %v950 = vrsqrt.pop %v948
        %v951 = vrsqrt.pop %v949
        %v952 = vmul.f32 %v938, %v950
        %v953 = vmul.f32 %v939, %v951
        %v955 = vlaneseq
        %v956 = vshrl.u32 %v955, 7
        %v957 = vsub.s32 0, %v956
        %v958 = vrot.slane %v929, %v957
        %v960 = vmul.f32 %v952, %v958
        %v961 = vmul.f32 %v953, %v958
        %v963 = vlaneseq
        %v964 = vshrl.u32 %v963, 7
        %v965 = vsub.s32 0, %v964
        %v966 = vrot.slane %v930, %v965
        %v968 = vadd.f32 %v960, %v966
        %v969 = vadd.f32 %v961, %v966
        %v970 = vpack.c.bf16 %v969, %v968
        %v971 = vld [vmem:[#allocation11] sm:$0xff]
        %v972 = vld [vmem:[#allocation11 + $0x8] sm:$0xf]
        %v973 = vld [vmem:[#allocation11 + $0xc] sm:$0xff]
        %v974 = vld [vmem:[#allocation11 + $0x14] sm:$0xf]
        %v975 = vld [vmem:[#allocation11 + $0x18] sm:$0xff]
        %v976 = vld [vmem:[#allocation11 + $0x20] sm:$0xf]
        %v977 = vld [vmem:[#allocation11 + $0x24] sm:$0xff]
        %v978 = vld [vmem:[#allocation11 + $0x2c] sm:$0xf]
        %v979 = vld [vmem:[#allocation11 + $0x30] sm:$0xff]
        %v980 = vld [vmem:[#allocation11 + $0x38] sm:$0xf]
        %v981 = vld [vmem:[#allocation11 + $0x3c] sm:$0xff]
        %v982 = vld [vmem:[#allocation11 + $0x44] sm:$0xf]
        %v983 = vld [vmem:[#allocation11 + $0x48] sm:$0xff]
        %v984 = vld [vmem:[#allocation11 + $0x50] sm:$0xf]
        %v985 = vld [vmem:[#allocation11 + $0x54] sm:$0xff]
        %v986 = vld [vmem:[#allocation11 + $0x5c] sm:$0xf]
        %v987 = vld [vmem:[#allocation11 + $0x60] sm:$0xff]
        %v988 = vld [vmem:[#allocation11 + $0x68] sm:$0xf]
        %v989 = vld [vmem:[#allocation11 + $0x6c] sm:$0xff]
        %v990 = vld [vmem:[#allocation11 + $0x74] sm:$0xf]
        %v991 = vld [vmem:[#allocation11 + $0x78] sm:$0xff]
        %v992 = vld [vmem:[#allocation11 + $0x80] sm:$0xf]
        %v993 = vld [vmem:[#allocation11 + $0x84] sm:$0xff]
        %v994 = vld [vmem:[#allocation11 + $0x8c] sm:$0xf]
        %v995 = vld [vmem:[#allocation11 + $0x90] sm:$0xff]
        %v996 = vld [vmem:[#allocation11 + $0x98] sm:$0xf]
        %v997 = vld [vmem:[#allocation11 + $0x9c] sm:$0xff]
        %v998 = vld [vmem:[#allocation11 + $0xa4] sm:$0xf]
        %v999 = vld [vmem:[#allocation11 + $0xa8] sm:$0xff]
        %v1000 = vld [vmem:[#allocation11 + $0xb0] sm:$0xf]
        %v1001 = vld [vmem:[#allocation11 + $0xb4] sm:$0xff]
        %v1002 = vld [vmem:[#allocation11 + $0xbc] sm:$0xf]
        %v1003 = vld [vmem:[#allocation13] sm:$0x7]
        %v1005 = vlaneseq
        %v1006 = vshrl.u32 %v1005, 7
        %v1007 = vsub.s32 0, %v1006
        %v1008 = vrot.slane %v1003, %v1007
        %v1009 = vlaneseq
        %v1010 = vshrl.u32 %v1009, 7
        %v1011 = vsub.s32 1, %v1010
        %v1012 = vrot.slane %v1003, %v1011
        %v1013 = vlaneseq
        %v1014 = vshrl.u32 %v1013, 7
        %v1015 = vsub.s32 2, %v1014
        %v1016 = vrot.slane %v1003, %v1015
        %v1052 = vunpack.c.l.b16 %v971
        %v1053 = vunpack.c.h.b16 %v971
        %v1054 = vunpack.c.l.b16 %v972
        %v1055 = vunpack.c.l.b16 %v973
        %v1056 = vunpack.c.h.b16 %v973
        %v1057 = vunpack.c.l.b16 %v974
        %v1058 = vunpack.c.l.b16 %v975
        %v1059 = vunpack.c.h.b16 %v975
        %v1060 = vunpack.c.l.b16 %v976
        %v1061 = vunpack.c.l.b16 %v977
        %v1062 = vunpack.c.h.b16 %v977
        %v1063 = vunpack.c.l.b16 %v978
        %v1064 = vunpack.c.l.b16 %v979
        %v1065 = vunpack.c.h.b16 %v979
        %v1066 = vunpack.c.l.b16 %v980
        %v1067 = vunpack.c.l.b16 %v981
        %v1068 = vunpack.c.h.b16 %v981
        %v1069 = vunpack.c.l.b16 %v982
        %v1070 = vunpack.c.l.b16 %v983
        %v1071 = vunpack.c.h.b16 %v983
        %v1072 = vunpack.c.l.b16 %v984
        %v1073 = vunpack.c.l.b16 %v985
        %v1074 = vunpack.c.h.b16 %v985
        %v1075 = vunpack.c.l.b16 %v986
        %v1076 = vunpack.c.l.b16 %v987
        %v1077 = vunpack.c.h.b16 %v987
        %v1078 = vunpack.c.l.b16 %v988
        %v1079 = vunpack.c.l.b16 %v989
        %v1080 = vunpack.c.h.b16 %v989
        %v1081 = vunpack.c.l.b16 %v990
        %v1082 = vunpack.c.l.b16 %v991
        %v1083 = vunpack.c.h.b16 %v991
        %v1084 = vunpack.c.l.b16 %v992
        %v1085 = vunpack.c.l.b16 %v993
        %v1086 = vunpack.c.h.b16 %v993
        %v1087 = vunpack.c.l.b16 %v994
        %v1088 = vunpack.c.l.b16 %v995
        %v1089 = vunpack.c.h.b16 %v995
        %v1090 = vunpack.c.l.b16 %v996
        %v1091 = vunpack.c.l.b16 %v997
        %v1092 = vunpack.c.h.b16 %v997
        %v1093 = vunpack.c.l.b16 %v998
        %v1094 = vunpack.c.l.b16 %v999
        %v1095 = vunpack.c.h.b16 %v999
        %v1096 = vunpack.c.l.b16 %v1000
        %v1097 = vunpack.c.l.b16 %v1001
        %v1098 = vunpack.c.h.b16 %v1001
        %v1099 = vunpack.c.l.b16 %v1002
        %v1100 = vpack.c.b16 %v1055, %v1052
        %v1101 = vpack.c.b16 %v1056, %v1053
        %v1102 = vpack.c.b16 %v1057, %v1054
        %v1103 = vpack.c.b16 %v1061, %v1058
        %v1104 = vpack.c.b16 %v1062, %v1059
        %v1105 = vpack.c.b16 %v1063, %v1060
        %v1106 = vpack.c.b16 %v1067, %v1064
        %v1107 = vpack.c.b16 %v1068, %v1065
        %v1108 = vpack.c.b16 %v1069, %v1066
        %v1109 = vpack.c.b16 %v1073, %v1070
        %v1110 = vpack.c.b16 %v1074, %v1071
        %v1111 = vpack.c.b16 %v1075, %v1072
        %v1112 = vpack.c.b16 %v1079, %v1076
        %v1113 = vpack.c.b16 %v1080, %v1077
        %v1114 = vpack.c.b16 %v1081, %v1078
        %v1115 = vpack.c.b16 %v1085, %v1082
        %v1116 = vpack.c.b16 %v1086, %v1083
        %v1117 = vpack.c.b16 %v1087, %v1084
        %v1118 = vpack.c.b16 %v1091, %v1088
        %v1119 = vpack.c.b16 %v1092, %v1089
        %v1120 = vpack.c.b16 %v1093, %v1090
        %v1121 = vpack.c.b16 %v1097, %v1094
        %v1122 = vpack.c.b16 %v1098, %v1095
        %v1123 = vpack.c.b16 %v1099, %v1096
        %1148 = vmatprep.subr.bf16.mxu0 %v1101
        %1149 = vmatpush1.bf16.msra.mxu0 %v1100
        %1150 = vmatprep.subr.bf16.mxu0 %v1104
        %1151 = vmatpush1.bf16.msra.mxu0 %v1103
        %1152 = vmatprep.subr.bf16.mxu0 %v1107
        %1153 = vmatpush1.bf16.msra.mxu0 %v1106
        %1154 = vmatprep.subr.bf16.mxu0 %v1110
        %1155 = vmatpush1.bf16.msra.mxu0 %v1109
        %1156 = vmatprep.subr.bf16.mxu0 %v1113
        %1157 = vmatpush1.bf16.msra.mxu0 %v1112
        %1158 = vmatprep.subr.bf16.mxu0 %v1116
        %1159 = vmatpush1.bf16.msra.mxu0 %v1115
        %1160 = vmatprep.subr.bf16.mxu0 %v1119
        %1161 = vmatpush1.bf16.msra.mxu0 %v1118
        %1162 = vmatprep.subr.bf16.mxu0 %v1122
        %1163 = vmatpush1.bf16.msra.mxu0 %v1121
        %1164 = vmatprep.subr.bf16.mxu0 0
        %1165 = vmatpush1.bf16.msra.mxu0 0
        %1166 = vmatprep.subr.bf16.mxu0 0
        %1167 = vmatpush1.bf16.msra.mxu0 0
        %1168 = vmatprep.subr.bf16.mxu0 0
        %1169 = vmatpush1.bf16.msra.mxu0 0
        %1170 = vmatprep.subr.bf16.mxu0 0
        %1171 = vmatpush1.bf16.msra.mxu0 0
        %1172 = vmatprep.subr.bf16.mxu0 0
        %1173 = vmatpush1.bf16.msra.mxu0 0
        %1174 = vmatprep.subr.bf16.mxu0 0
        %1175 = vmatpush1.bf16.msra.mxu0 0
        %1176 = vmatprep.subr.bf16.mxu0 0
        %1177 = vmatpush1.bf16.msra.mxu0 0
        %1178 = vmatprep.subr.bf16.mxu0 0
        %1179 = vmatpush1.bf16.msra.mxu0 0
        %1180 = vmatprep.mubr.bf16.mxu0 0
        %1181 = vmatmul.mubr.bf16.gmra.mrb[0].mxu0 %v970
        %v1182 = vpop.f32.mrb[0].mxu0
        %v1183 = vadd.f32 %v1008, %v1182
        %v1184 = vpop.f32.mrb[0].mxu0
        %v1185 = vadd.f32 %v1012, %v1184
        %v1186 = vpop.f32.mrb[0].mxu0
        %v1187 = vadd.f32 %v1008, %v1186
        %v1188 = vpop.f32.mrb[0].mxu0
        %v1189 = vadd.f32 %v1012, %v1188
        %1190 = vdwg.mxu0
        %1191 = vmatprep.subr.bf16.mxu0 0
        %1192 = vmatpush1.bf16.msra.mxu0 %v1102
        %1193 = vmatprep.subr.bf16.mxu0 0
        %1194 = vmatpush1.bf16.msra.mxu0 %v1105
        %1195 = vmatprep.subr.bf16.mxu0 0
        %1196 = vmatpush1.bf16.msra.mxu0 %v1108
        %1197 = vmatprep.subr.bf16.mxu0 0
        %1198 = vmatpush1.bf16.msra.mxu0 %v1111
        %1199 = vmatprep.subr.bf16.mxu0 0
        %1200 = vmatpush1.bf16.msra.mxu0 %v1114
        %1201 = vmatprep.subr.bf16.mxu0 0
        %1202 = vmatpush1.bf16.msra.mxu0 %v1117
        %1203 = vmatprep.subr.bf16.mxu0 0
        %1204 = vmatpush1.bf16.msra.mxu0 %v1120
        %1205 = vmatprep.subr.bf16.mxu0 0
        %1206 = vmatpush1.bf16.msra.mxu0 %v1123
        %1207 = vmatprep.subr.bf16.mxu0 0
        %1208 = vmatpush1.bf16.msra.mxu0 0
        %1209 = vmatprep.subr.bf16.mxu0 0
        %1210 = vmatpush1.bf16.msra.mxu0 0
        %1211 = vmatprep.subr.bf16.mxu0 0
        %1212 = vmatpush1.bf16.msra.mxu0 0
        %1213 = vmatprep.subr.bf16.mxu0 0
        %1214 = vmatpush1.bf16.msra.mxu0 0
        %1215 = vmatprep.subr.bf16.mxu0 0
        %1216 = vmatpush1.bf16.msra.mxu0 0
        %1217 = vmatprep.subr.bf16.mxu0 0
        %1218 = vmatpush1.bf16.msra.mxu0 0
        %1219 = vmatprep.subr.bf16.mxu0 0
        %1220 = vmatpush1.bf16.msra.mxu0 0
        %1221 = vmatprep.subr.bf16.mxu0 0
        %1222 = vmatpush1.bf16.msra.mxu0 0
        %1223 = vmatprep.mubr.bf16.mxu0 0
        %1224 = vmatmul.mubr.bf16.gmra.mrb[0].mxu0 %v970
        %v1225 = vpop.f32.mrb[0].mxu0
        %v1226 = vadd.f32 %v1016, %v1225
        %v1227 = vpop.f32.mrb[0].mxu0
        %v1228 = vpop.f32.mrb[0].mxu0
        %v1229 = vadd.f32 %v1016, %v1228
        %v1230 = vpop.f32.mrb[0].mxu0
        %1231 = vdwg.mxu0
        %1234 = vrot.lane.b32.xlu0 %v1183, 96
        %v1235 = vpop.permute.xlu0 %1234
        %1236 = vrot.lane.b32.xlu0 %v1187, 96
        %v1237 = vpop.permute.xlu0 %1236
        %1240 = vrot.lane.b32.xlu0 %v1183, 64
        %v1241 = vpop.permute.xlu0 %1240
        %1242 = vrot.lane.b32.xlu0 %v1187, 64
        %v1243 = vpop.permute.xlu0 %1242
        %1246 = vrot.lane.b32.xlu0 %v1183, 32
        %v1247 = vpop.permute.xlu0 %1246
        %1248 = vrot.lane.b32.xlu0 %v1187, 32
        %v1249 = vpop.permute.xlu0 %1248
        %v1252 = vpack.c.bf16 %v1187, %v1183
        %v1253 = vpack.c.bf16 %v1237, %v1235
        %v1254 = vpack.c.bf16 %v1243, %v1241
        %v1255 = vpack.c.bf16 %v1249, %v1247
        %1258 = vrot.lane.b32.xlu0 %v1185, 96
        %v1259 = vpop.permute.xlu0 %1258
        %1260 = vrot.lane.b32.xlu0 %v1189, 96
        %v1261 = vpop.permute.xlu0 %1260
        %1264 = vrot.lane.b32.xlu0 %v1185, 64
        %v1265 = vpop.permute.xlu0 %1264
        %1266 = vrot.lane.b32.xlu0 %v1189, 64
        %v1267 = vpop.permute.xlu0 %1266
        %1270 = vrot.lane.b32.xlu0 %v1185, 32
        %v1271 = vpop.permute.xlu0 %1270
        %1272 = vrot.lane.b32.xlu0 %v1189, 32
        %v1273 = vpop.permute.xlu0 %1272
        %v1276 = vpack.c.bf16 %v1189, %v1185
        %v1277 = vpack.c.bf16 %v1261, %v1259
        %v1278 = vpack.c.bf16 %v1267, %v1265
        %v1279 = vpack.c.bf16 %v1273, %v1271
        %1282 = vrot.lane.b32.xlu0 %v1226, 96
        %v1283 = vpop.permute.xlu0 %1282
        %1284 = vrot.lane.b32.xlu0 %v1229, 96
        %v1285 = vpop.permute.xlu0 %1284
        %1288 = vrot.lane.b32.xlu0 %v1226, 64
        %v1289 = vpop.permute.xlu0 %1288
        %1290 = vrot.lane.b32.xlu0 %v1229, 64
        %v1291 = vpop.permute.xlu0 %1290
        %1294 = vrot.lane.b32.xlu0 %v1226, 32
        %v1295 = vpop.permute.xlu0 %1294
        %1296 = vrot.lane.b32.xlu0 %v1229, 32
        %v1297 = vpop.permute.xlu0 %1296
        %v1300 = vpack.c.bf16 %v1229, %v1226
        %v1301 = vpack.c.bf16 %v1285, %v1283
        %v1302 = vpack.c.bf16 %v1291, %v1289
        %v1303 = vpack.c.bf16 %v1297, %v1295
        %vm1304 = vcmask 261120
        %v1306 = vsel %vm1304, %v1252, 0
        %v1309 = vsel %vm1304, %v1276, 0
        %1311 = vmatprep.subr.bf16.mxu0 0
        %1312 = vmatpush1.bf16.xpose.msra.mxu0 %v1309
        %1313 = vmatprep.subr.bf16.mxu0 0
        %1314 = vmatpush1.bf16.xpose.msra.mxu0 0
        %1315 = vmatprep.subr.bf16.mxu0 0
        %1316 = vmatpush1.bf16.xpose.msra.mxu0 0
        %1317 = vmatprep.subr.bf16.mxu0 0
        %1318 = vmatpush1.bf16.xpose.msra.mxu0 0
        %1319 = vmatprep.subr.bf16.mxu0 0
        %1320 = vmatpush1.bf16.xpose.msra.mxu0 0
        %1321 = vmatprep.subr.bf16.mxu0 0
        %1322 = vmatpush1.bf16.xpose.msra.mxu0 0
        %1323 = vmatprep.subr.bf16.mxu0 0
        %1324 = vmatpush1.bf16.xpose.msra.mxu0 0
        %1325 = vmatprep.subr.bf16.mxu0 0
        %1326 = vmatpush1.bf16.xpose.msra.mxu0 0
        %1327 = vmatprep.subr.bf16.mxu0 0
        %1328 = vmatpush1.bf16.xpose.msra.mxu0 0
        %1329 = vmatprep.subr.bf16.mxu0 0
        %1330 = vmatpush1.bf16.xpose.msra.mxu0 0
        %1331 = vmatprep.subr.bf16.mxu0 0
        %1332 = vmatpush1.bf16.xpose.msra.mxu0 0
        %1333 = vmatprep.subr.bf16.mxu0 0
        %1334 = vmatpush1.bf16.xpose.msra.mxu0 0
        %1335 = vmatprep.subr.bf16.mxu0 0
        %1336 = vmatpush1.bf16.xpose.msra.mxu0 0
        %1337 = vmatprep.subr.bf16.mxu0 0
        %1338 = vmatpush1.bf16.xpose.msra.mxu0 0
        %1339 = vmatprep.subr.bf16.mxu0 0
        %1340 = vmatpush1.bf16.xpose.msra.mxu0 0
        %1341 = vmatprep.subr.bf16.mxu0 0
        %1342 = vmatpush1.bf16.xpose.msra.mxu0 0
        %1343 = vmatprep.mubr.bf16.mxu0 0
        %1344 = vmatmul.mubr.bf16.gmra.mrb[0].mxu0 %v1306
        %v1345 = vpop.f32.mrb[0].mxu0
        %v1346 = vadd.f32 0.0, %v1345
        %v1347 = vpop.f32.mrb[0].mxu0
        %v1348 = vpop.f32.mrb[0].mxu0
        %v1349 = vadd.f32 0.0, %v1348
        %v1350 = vpop.f32.mrb[0].mxu0
        %1351 = vdwg.mxu0
        %v1353 = vsel %vm1304, %v1253, 0
        %v1356 = vsel %vm1304, %v1277, 0
        %1358 = vmatprep.subr.bf16.mxu0 0
        %1359 = vmatpush1.bf16.xpose.msra.mxu0 %v1356
        %1360 = vmatprep.subr.bf16.mxu0 0
        %1361 = vmatpush1.bf16.xpose.msra.mxu0 0
        %1362 = vmatprep.subr.bf16.mxu0 0
        %1363 = vmatpush1.bf16.xpose.msra.mxu0 0
        %1364 = vmatprep.subr.bf16.mxu0 0
        %1365 = vmatpush1.bf16.xpose.msra.mxu0 0
        %1366 = vmatprep.subr.bf16.mxu0 0
        %1367 = vmatpush1.bf16.xpose.msra.mxu0 0
        %1368 = vmatprep.subr.bf16.mxu0 0
        %1369 = vmatpush1.bf16.xpose.msra.mxu0 0
        %1370 = vmatprep.subr.bf16.mxu0 0
        %1371 = vmatpush1.bf16.xpose.msra.mxu0 0
        %1372 = vmatprep.subr.bf16.mxu0 0
        %1373 = vmatpush1.bf16.xpose.msra.mxu0 0
        %1374 = vmatprep.subr.bf16.mxu0 0
        %1375 = vmatpush1.bf16.xpose.msra.mxu0 0
        %1376 = vmatprep.subr.bf16.mxu0 0
        %1377 = vmatpush1.bf16.xpose.msra.mxu0 0
        %1378 = vmatprep.subr.bf16.mxu0 0
        %1379 = vmatpush1.bf16.xpose.msra.mxu0 0
        %1380 = vmatprep.subr.bf16.mxu0 0
        %1381 = vmatpush1.bf16.xpose.msra.mxu0 0
        %1382 = vmatprep.subr.bf16.mxu0 0
        %1383 = vmatpush1.bf16.xpose.msra.mxu0 0
        %1384 = vmatprep.subr.bf16.mxu0 0
        %1385 = vmatpush1.bf16.xpose.msra.mxu0 0
        %1386 = vmatprep.subr.bf16.mxu0 0
        %1387 = vmatpush1.bf16.xpose.msra.mxu0 0
        %1388 = vmatprep.subr.bf16.mxu0 0
        %1389 = vmatpush1.bf16.xpose.msra.mxu0 0
        %1390 = vmatprep.mubr.bf16.mxu0 0
        %1391 = vmatmul.mubr.bf16.gmra.mrb[0].mxu0 %v1353
        %v1392 = vpop.f32.mrb[0].mxu0
        %v1393 = vadd.f32 0.0, %v1392
        %v1394 = vpop.f32.mrb[0].mxu0
        %v1395 = vpop.f32.mrb[0].mxu0
        %v1396 = vadd.f32 0.0, %v1395
        %v1397 = vpop.f32.mrb[0].mxu0
        %1398 = vdwg.mxu0
        %v1400 = vsel %vm1304, %v1254, 0
        %v1403 = vsel %vm1304, %v1278, 0
        %1405 = vmatprep.subr.bf16.mxu0 0
        %1406 = vmatpush1.bf16.xpose.msra.mxu0 %v1403
        %1407 = vmatprep.subr.bf16.mxu0 0
        %1408 = vmatpush1.bf16.xpose.msra.mxu0 0
        %1409 = vmatprep.subr.bf16.mxu0 0
        %1410 = vmatpush1.bf16.xpose.msra.mxu0 0
        %1411 = vmatprep.subr.bf16.mxu0 0
        %1412 = vmatpush1.bf16.xpose.msra.mxu0 0
        %1413 = vmatprep.subr.bf16.mxu0 0
        %1414 = vmatpush1.bf16.xpose.msra.mxu0 0
        %1415 = vmatprep.subr.bf16.mxu0 0
        %1416 = vmatpush1.bf16.xpose.msra.mxu0 0
        %1417 = vmatprep.subr.bf16.mxu0 0
        %1418 = vmatpush1.bf16.xpose.msra.mxu0 0
        %1419 = vmatprep.subr.bf16.mxu0 0
        %1420 = vmatpush1.bf16.xpose.msra.mxu0 0
        %1421 = vmatprep.subr.bf16.mxu0 0
        %1422 = vmatpush1.bf16.xpose.msra.mxu0 0
        %1423 = vmatprep.subr.bf16.mxu0 0
        %1424 = vmatpush1.bf16.xpose.msra.mxu0 0
        %1425 = vmatprep.subr.bf16.mxu0 0
        %1426 = vmatpush1.bf16.xpose.msra.mxu0 0
        %1427 = vmatprep.subr.bf16.mxu0 0
        %1428 = vmatpush1.bf16.xpose.msra.mxu0 0
        %1429 = vmatprep.subr.bf16.mxu0 0
        %1430 = vmatpush1.bf16.xpose.msra.mxu0 0
        %1431 = vmatprep.subr.bf16.mxu0 0
        %1432 = vmatpush1.bf16.xpose.msra.mxu0 0
        %1433 = vmatprep.subr.bf16.mxu0 0
        %1434 = vmatpush1.bf16.xpose.msra.mxu0 0
        %1435 = vmatprep.subr.bf16.mxu0 0
        %1436 = vmatpush1.bf16.xpose.msra.mxu0 0
        %1437 = vmatprep.mubr.bf16.mxu0 0
        %1438 = vmatmul.mubr.bf16.gmra.mrb[0].mxu0 %v1400
        %v1439 = vpop.f32.mrb[0].mxu0
        %v1440 = vadd.f32 0.0, %v1439
        %v1441 = vpop.f32.mrb[0].mxu0
        %v1442 = vpop.f32.mrb[0].mxu0
        %v1443 = vadd.f32 0.0, %v1442
        %v1444 = vpop.f32.mrb[0].mxu0
        %1445 = vdwg.mxu0
        %v1447 = vsel %vm1304, %v1255, 0
        %v1450 = vsel %vm1304, %v1279, 0
        %1452 = vmatprep.subr.bf16.mxu0 0
        %1453 = vmatpush1.bf16.xpose.msra.mxu0 %v1450
        %1454 = vmatprep.subr.bf16.mxu0 0
        %1455 = vmatpush1.bf16.xpose.msra.mxu0 0
        %1456 = vmatprep.subr.bf16.mxu0 0
        %1457 = vmatpush1.bf16.xpose.msra.mxu0 0
        %1458 = vmatprep.subr.bf16.mxu0 0
        %1459 = vmatpush1.bf16.xpose.msra.mxu0 0
        %1460 = vmatprep.subr.bf16.mxu0 0
        %1461 = vmatpush1.bf16.xpose.msra.mxu0 0
        %1462 = vmatprep.subr.bf16.mxu0 0
        %1463 = vmatpush1.bf16.xpose.msra.mxu0 0
        %1464 = vmatprep.subr.bf16.mxu0 0
        %1465 = vmatpush1.bf16.xpose.msra.mxu0 0
        %1466 = vmatprep.subr.bf16.mxu0 0
        %1467 = vmatpush1.bf16.xpose.msra.mxu0 0
        %1468 = vmatprep.subr.bf16.mxu0 0
        %1469 = vmatpush1.bf16.xpose.msra.mxu0 0
        %1470 = vmatprep.subr.bf16.mxu0 0
        %1471 = vmatpush1.bf16.xpose.msra.mxu0 0
        %1472 = vmatprep.subr.bf16.mxu0 0
        %1473 = vmatpush1.bf16.xpose.msra.mxu0 0
        %1474 = vmatprep.subr.bf16.mxu0 0
        %1475 = vmatpush1.bf16.xpose.msra.mxu0 0
        %1476 = vmatprep.subr.bf16.mxu0 0
        %1477 = vmatpush1.bf16.xpose.msra.mxu0 0
        %1478 = vmatprep.subr.bf16.mxu0 0
        %1479 = vmatpush1.bf16.xpose.msra.mxu0 0
        %1480 = vmatprep.subr.bf16.mxu0 0
        %1481 = vmatpush1.bf16.xpose.msra.mxu0 0
        %1482 = vmatprep.subr.bf16.mxu0 0
        %1483 = vmatpush1.bf16.xpose.msra.mxu0 0
        %1484 = vmatprep.mubr.bf16.mxu0 0
        %1485 = vmatmul.mubr.bf16.gmra.mrb[0].mxu0 %v1447
        %v1486 = vpop.f32.mrb[0].mxu0
        %v1487 = vadd.f32 0.0, %v1486
        %v1488 = vpop.f32.mrb[0].mxu0
        %v1489 = vpop.f32.mrb[0].mxu0
        %v1490 = vadd.f32 0.0, %v1489
        %v1491 = vpop.f32.mrb[0].mxu0
        %1492 = vdwg.mxu0
        %vm1493 = vcmask 130048
        %v1494 = vsel %vm1493, %v1346, -inf
        %1495 = vmax.xlane.f32.xlu0 %v1494
        %v1496 = vpop.xlane.xlu0 %1495
        %v1497 = vsel %vm1493, %v1349, -inf
        %1498 = vmax.xlane.f32.xlu0 %v1497
        %v1499 = vpop.xlane.xlu0 %1498
        %v1500 = vsel %vm1493, %v1393, -inf
        %1501 = vmax.xlane.f32.xlu0 %v1500
        %v1502 = vpop.xlane.xlu0 %1501
        %v1503 = vsel %vm1493, %v1396, -inf
        %1504 = vmax.xlane.f32.xlu0 %v1503
        %v1505 = vpop.xlane.xlu0 %1504
        %v1506 = vsel %vm1493, %v1440, -inf
        %1507 = vmax.xlane.f32.xlu0 %v1506
        %v1508 = vpop.xlane.xlu0 %1507
        %v1509 = vsel %vm1493, %v1443, -inf
        %1510 = vmax.xlane.f32.xlu0 %v1509
        %v1511 = vpop.xlane.xlu0 %1510
        %v1512 = vsel %vm1493, %v1487, -inf
        %1513 = vmax.xlane.f32.xlu0 %v1512
        %v1514 = vpop.xlane.xlu0 %1513
        %v1515 = vsel %vm1493, %v1490, -inf
        %1516 = vmax.xlane.f32.xlu0 %v1515
        %v1517 = vpop.xlane.xlu0 %1516
        %v1518 = vsub.f32 %v1346, %v1496
        %v1519 = vsub.f32 %v1349, %v1499
        %v1520 = vsub.f32 %v1393, %v1502
        %v1521 = vsub.f32 %v1396, %v1505
        %v1522 = vsub.f32 %v1440, %v1508
        %v1523 = vsub.f32 %v1443, %v1511
        %v1524 = vsub.f32 %v1487, %v1514
        %v1525 = vsub.f32 %v1490, %v1517
        %v1526 = vmul.f32 %v1518, 1.442695
        %v1527 = vpow.pop %v1526
        %v1528 = vmul.f32 %v1519, 1.442695
        %v1529 = vpow.pop %v1528
        %v1530 = vmul.f32 %v1520, 1.442695
        %v1531 = vpow.pop %v1530
        %v1532 = vmul.f32 %v1521, 1.442695
        %v1533 = vpow.pop %v1532
        %v1534 = vmul.f32 %v1522, 1.442695
        %v1535 = vpow.pop %v1534
        %v1536 = vmul.f32 %v1523, 1.442695
        %v1537 = vpow.pop %v1536
        %v1538 = vmul.f32 %v1524, 1.442695
        %v1539 = vpow.pop %v1538
        %v1540 = vmul.f32 %v1525, 1.442695
        %v1541 = vpow.pop %v1540
        %v1542 = vsel %vm1493, %v1527, 0.0
        %1543 = vadd.xlane.f32.xlu0 %v1542
        %v1544 = vpop.xlane.xlu0 %1543
        %v1545 = vsel %vm1493, %v1529, 0.0
        %1546 = vadd.xlane.f32.xlu0 %v1545
        %v1547 = vpop.xlane.xlu0 %1546
        %v1548 = vsel %vm1493, %v1531, 0.0
        %1549 = vadd.xlane.f32.xlu0 %v1548
        %v1550 = vpop.xlane.xlu0 %1549
        %v1551 = vsel %vm1493, %v1533, 0.0
        %1552 = vadd.xlane.f32.xlu0 %v1551
        %v1553 = vpop.xlane.xlu0 %1552
        %v1554 = vsel %vm1493, %v1535, 0.0
        %1555 = vadd.xlane.f32.xlu0 %v1554
        %v1556 = vpop.xlane.xlu0 %1555
        %v1557 = vsel %vm1493, %v1537, 0.0
        %1558 = vadd.xlane.f32.xlu0 %v1557
        %v1559 = vpop.xlane.xlu0 %1558
        %v1560 = vsel %vm1493, %v1539, 0.0
        %1561 = vadd.xlane.f32.xlu0 %v1560
        %v1562 = vpop.xlane.xlu0 %1561
        %v1563 = vsel %vm1493, %v1541, 0.0
        %1564 = vadd.xlane.f32.xlu0 %v1563
        %v1565 = vpop.xlane.xlu0 %1564
        %v1566 = vrcp.pop %v1544
        %v1567 = vrcp.pop %v1547
        %v1568 = vrcp.pop %v1550
        %v1569 = vrcp.pop %v1553
        %v1570 = vrcp.pop %v1556
        %v1571 = vrcp.pop %v1559
        %v1572 = vrcp.pop %v1562
        %v1573 = vrcp.pop %v1565
        %v1574 = vmul.f32 %v1527, %v1566
        %v1575 = vmul.f32 %v1529, %v1567
        %v1576 = vmul.f32 %v1531, %v1568
        %v1577 = vmul.f32 %v1533, %v1569
        %v1578 = vmul.f32 %v1535, %v1570
        %v1579 = vmul.f32 %v1537, %v1571
        %v1580 = vmul.f32 %v1539, %v1572
        %v1581 = vmul.f32 %v1541, %v1573
        %v1582 = vpack.c.bf16 %v1575, %v1574
        %v1583 = vpack.c.bf16 %v1577, %v1576
        %v1584 = vpack.c.bf16 %v1579, %v1578
        %v1585 = vpack.c.bf16 %v1581, %v1580
        %v1587 = vsel %vm1493, %v1582, 0
        %1589 = vmatprep.subr.bf16.mxu0 0
        %1590 = vmatpush1.bf16.msra.mxu0 %v1300
        %1591 = vmatprep.subr.bf16.mxu0 0
        %1592 = vmatpush1.bf16.msra.mxu0 0
        %1593 = vmatprep.subr.bf16.mxu0 0
        %1594 = vmatpush1.bf16.msra.mxu0 0
        %1595 = vmatprep.subr.bf16.mxu0 0
        %1596 = vmatpush1.bf16.msra.mxu0 0
        %1597 = vmatprep.subr.bf16.mxu0 0
        %1598 = vmatpush1.bf16.msra.mxu0 0
        %1599 = vmatprep.subr.bf16.mxu0 0
        %1600 = vmatpush1.bf16.msra.mxu0 0
        %1601 = vmatprep.subr.bf16.mxu0 0
        %1602 = vmatpush1.bf16.msra.mxu0 0
        %1603 = vmatprep.subr.bf16.mxu0 0
        %1604 = vmatpush1.bf16.msra.mxu0 0
        %1605 = vmatprep.subr.bf16.mxu0 0
        %1606 = vmatpush1.bf16.msra.mxu0 0
        %1607 = vmatprep.subr.bf16.mxu0 0
        %1608 = vmatpush1.bf16.msra.mxu0 0
        %1609 = vmatprep.subr.bf16.mxu0 0
        %1610 = vmatpush1.bf16.msra.mxu0 0
        %1611 = vmatprep.subr.bf16.mxu0 0
        %1612 = vmatpush1.bf16.msra.mxu0 0
        %1613 = vmatprep.subr.bf16.mxu0 0
        %1614 = vmatpush1.bf16.msra.mxu0 0
        %1615 = vmatprep.subr.bf16.mxu0 0
        %1616 = vmatpush1.bf16.msra.mxu0 0
        %1617 = vmatprep.subr.bf16.mxu0 0
        %1618 = vmatpush1.bf16.msra.mxu0 0
        %1619 = vmatprep.subr.bf16.mxu0 0
        %1620 = vmatpush1.bf16.msra.mxu0 0
        %1621 = vmatprep.mubr.bf16.mxu0 0
        %1622 = vmatmul.mubr.bf16.gmra.mrb[0].mxu0 %v1587
        %v1623 = vpop.f32.mrb[0].mxu0
        %v1624 = vadd.f32 0.0, %v1623
        %v1625 = vpop.f32.mrb[0].mxu0
        %v1626 = vpop.f32.mrb[0].mxu0
        %v1627 = vadd.f32 0.0, %v1626
        %v1628 = vpop.f32.mrb[0].mxu0
        %1629 = vdwg.mxu0
        %v1631 = vsel %vm1493, %v1583, 0
        %1633 = vmatprep.subr.bf16.mxu0 0
        %1634 = vmatpush1.bf16.msra.mxu0 %v1301
        %1635 = vmatprep.subr.bf16.mxu0 0
        %1636 = vmatpush1.bf16.msra.mxu0 0
        %1637 = vmatprep.subr.bf16.mxu0 0
        %1638 = vmatpush1.bf16.msra.mxu0 0
        %1639 = vmatprep.subr.bf16.mxu0 0
        %1640 = vmatpush1.bf16.msra.mxu0 0
        %1641 = vmatprep.subr.bf16.mxu0 0
        %1642 = vmatpush1.bf16.msra.mxu0 0
        %1643 = vmatprep.subr.bf16.mxu0 0
        %1644 = vmatpush1.bf16.msra.mxu0 0
        %1645 = vmatprep.subr.bf16.mxu0 0
        %1646 = vmatpush1.bf16.msra.mxu0 0
        %1647 = vmatprep.subr.bf16.mxu0 0
        %1648 = vmatpush1.bf16.msra.mxu0 0
        %1649 = vmatprep.subr.bf16.mxu0 0
        %1650 = vmatpush1.bf16.msra.mxu0 0
        %1651 = vmatprep.subr.bf16.mxu0 0
        %1652 = vmatpush1.bf16.msra.mxu0 0
        %1653 = vmatprep.subr.bf16.mxu0 0
        %1654 = vmatpush1.bf16.msra.mxu0 0
        %1655 = vmatprep.subr.bf16.mxu0 0
        %1656 = vmatpush1.bf16.msra.mxu0 0
        %1657 = vmatprep.subr.bf16.mxu0 0
        %1658 = vmatpush1.bf16.msra.mxu0 0
        %1659 = vmatprep.subr.bf16.mxu0 0
        %1660 = vmatpush1.bf16.msra.mxu0 0
        %1661 = vmatprep.subr.bf16.mxu0 0
        %1662 = vmatpush1.bf16.msra.mxu0 0
        %1663 = vmatprep.subr.bf16.mxu0 0
        %1664 = vmatpush1.bf16.msra.mxu0 0
        %1665 = vmatprep.mubr.bf16.mxu0 0
        %1666 = vmatmul.mubr.bf16.gmra.mrb[0].mxu0 %v1631
        %v1667 = vpop.f32.mrb[0].mxu0
        %v1668 = vadd.f32 0.0, %v1667
        %v1669 = vpop.f32.mrb[0].mxu0
        %v1670 = vpop.f32.mrb[0].mxu0
        %v1671 = vadd.f32 0.0, %v1670
        %v1672 = vpop.f32.mrb[0].mxu0
        %1673 = vdwg.mxu0
        %v1675 = vsel %vm1493, %v1584, 0
        %1677 = vmatprep.subr.bf16.mxu0 0
        %1678 = vmatpush1.bf16.msra.mxu0 %v1302
        %1679 = vmatprep.subr.bf16.mxu0 0
        %1680 = vmatpush1.bf16.msra.mxu0 0
        %1681 = vmatprep.subr.bf16.mxu0 0
        %1682 = vmatpush1.bf16.msra.mxu0 0
        %1683 = vmatprep.subr.bf16.mxu0 0
        %1684 = vmatpush1.bf16.msra.mxu0 0
        %1685 = vmatprep.subr.bf16.mxu0 0
        %1686 = vmatpush1.bf16.msra.mxu0 0
        %1687 = vmatprep.subr.bf16.mxu0 0
        %1688 = vmatpush1.bf16.msra.mxu0 0
        %1689 = vmatprep.subr.bf16.mxu0 0
        %1690 = vmatpush1.bf16.msra.mxu0 0
        %1691 = vmatprep.subr.bf16.mxu0 0
        %1692 = vmatpush1.bf16.msra.mxu0 0
        %1693 = vmatprep.subr.bf16.mxu0 0
        %1694 = vmatpush1.bf16.msra.mxu0 0
        %1695 = vmatprep.subr.bf16.mxu0 0
        %1696 = vmatpush1.bf16.msra.mxu0 0
        %1697 = vmatprep.subr.bf16.mxu0 0
        %1698 = vmatpush1.bf16.msra.mxu0 0
        %1699 = vmatprep.subr.bf16.mxu0 0
        %1700 = vmatpush1.bf16.msra.mxu0 0
        %1701 = vmatprep.subr.bf16.mxu0 0
        %1702 = vmatpush1.bf16.msra.mxu0 0
        %1703 = vmatprep.subr.bf16.mxu0 0
        %1704 = vmatpush1.bf16.msra.mxu0 0
        %1705 = vmatprep.subr.bf16.mxu0 0
        %1706 = vmatpush1.bf16.msra.mxu0 0
        %1707 = vmatprep.subr.bf16.mxu0 0
        %1708 = vmatpush1.bf16.msra.mxu0 0
        %1709 = vmatprep.mubr.bf16.mxu0 0
        %1710 = vmatmul.mubr.bf16.gmra.mrb[0].mxu0 %v1675
        %v1711 = vpop.f32.mrb[0].mxu0
        %v1712 = vadd.f32 0.0, %v1711
        %v1713 = vpop.f32.mrb[0].mxu0
        %v1714 = vpop.f32.mrb[0].mxu0
        %v1715 = vadd.f32 0.0, %v1714
        %v1716 = vpop.f32.mrb[0].mxu0
        %1717 = vdwg.mxu0
        %v1719 = vsel %vm1493, %v1585, 0
        %1721 = vmatprep.subr.bf16.mxu0 0
        %1722 = vmatpush1.bf16.msra.mxu0 %v1303
        %1723 = vmatprep.subr.bf16.mxu0 0
        %1724 = vmatpush1.bf16.msra.mxu0 0
        %1725 = vmatprep.subr.bf16.mxu0 0
        %1726 = vmatpush1.bf16.msra.mxu0 0
        %1727 = vmatprep.subr.bf16.mxu0 0
        %1728 = vmatpush1.bf16.msra.mxu0 0
        %1729 = vmatprep.subr.bf16.mxu0 0
        %1730 = vmatpush1.bf16.msra.mxu0 0
        %1731 = vmatprep.subr.bf16.mxu0 0
        %1732 = vmatpush1.bf16.msra.mxu0 0
        %1733 = vmatprep.subr.bf16.mxu0 0
        %1734 = vmatpush1.bf16.msra.mxu0 0
        %1735 = vmatprep.subr.bf16.mxu0 0
        %1736 = vmatpush1.bf16.msra.mxu0 0
        %1737 = vmatprep.subr.bf16.mxu0 0
        %1738 = vmatpush1.bf16.msra.mxu0 0
        %1739 = vmatprep.subr.bf16.mxu0 0
        %1740 = vmatpush1.bf16.msra.mxu0 0
        %1741 = vmatprep.subr.bf16.mxu0 0
        %1742 = vmatpush1.bf16.msra.mxu0 0
        %1743 = vmatprep.subr.bf16.mxu0 0
        %1744 = vmatpush1.bf16.msra.mxu0 0
        %1745 = vmatprep.subr.bf16.mxu0 0
        %1746 = vmatpush1.bf16.msra.mxu0 0
        %1747 = vmatprep.subr.bf16.mxu0 0
        %1748 = vmatpush1.bf16.msra.mxu0 0
        %1749 = vmatprep.subr.bf16.mxu0 0
        %1750 = vmatpush1.bf16.msra.mxu0 0
        %1751 = vmatprep.subr.bf16.mxu0 0
        %1752 = vmatpush1.bf16.msra.mxu0 0
        %1753 = vmatprep.mubr.bf16.mxu0 0
        %1754 = vmatmul.mubr.bf16.gmra.mrb[0].mxu0 %v1719
        %v1755 = vpop.f32.mrb[0].mxu0
        %v1756 = vadd.f32 0.0, %v1755
        %v1757 = vpop.f32.mrb[0].mxu0
        %v1758 = vpop.f32.mrb[0].mxu0
        %v1759 = vadd.f32 0.0, %v1758
        %v1760 = vpop.f32.mrb[0].mxu0
        %1761 = vdwg.mxu0
        %v1762 = vpack.c.bf16 %v1627, %v1624
        %v1763 = vpack.c.bf16 %v1671, %v1668
        %v1764 = vpack.c.bf16 %v1715, %v1712
        %v1765 = vpack.c.bf16 %v1759, %v1756
        %v1766 = vld [vmem:[#allocation14] sm:$0xf]
        %v1767 = vld [vmem:[#allocation14 + $0x4] sm:$0xf]
        %v1768 = vld [vmem:[#allocation14 + $0x8] sm:$0xf]
        %v1769 = vld [vmem:[#allocation14 + $0xc] sm:$0xf]
        %v1770 = vld [vmem:[#allocation14 + $0x10] sm:$0xf]
        %v1771 = vld [vmem:[#allocation14 + $0x14] sm:$0xf]
        %v1772 = vld [vmem:[#allocation14 + $0x18] sm:$0xf]
        %v1773 = vld [vmem:[#allocation14 + $0x1c] sm:$0xf]
        %v1774 = vld [vmem:[#allocation14 + $0x20] sm:$0xf]
        %v1775 = vld [vmem:[#allocation14 + $0x24] sm:$0xf]
        %v1776 = vld [vmem:[#allocation14 + $0x28] sm:$0xf]
        %v1777 = vld [vmem:[#allocation14 + $0x2c] sm:$0xf]
        %v1778 = vld [vmem:[#allocation14 + $0x30] sm:$0xf]
        %v1779 = vld [vmem:[#allocation14 + $0x34] sm:$0xf]
        %v1780 = vld [vmem:[#allocation14 + $0x38] sm:$0xf]
        %v1781 = vld [vmem:[#allocation14 + $0x3c] sm:$0xf]
        %v1786 = vunpack.c.l.b16 %v1766
        %v1787 = vunpack.c.l.b16 %v1767
        %v1788 = vunpack.c.l.b16 %v1768
        %v1789 = vunpack.c.l.b16 %v1769
        %v1790 = vpack.c.b16 %v1787, %v1786
        %v1791 = vpack.c.b16 %v1789, %v1788
        %v1795 = vsel %vm1304, %v1762, 0
        %1797 = vmatprep.subr.bf16.mxu0 0
        %1798 = vmatpush1.bf16.msra.mxu0 %v1790
        %1799 = vmatprep.subr.bf16.mxu0 0
        %1800 = vmatpush1.bf16.msra.mxu0 %v1791
        %1801 = vmatprep.subr.bf16.mxu0 0
        %1802 = vmatpush1.bf16.msra.mxu0 0
        %1803 = vmatprep.subr.bf16.mxu0 0
        %1804 = vmatpush1.bf16.msra.mxu0 0
        %1805 = vmatprep.subr.bf16.mxu0 0
        %1806 = vmatpush1.bf16.msra.mxu0 0
        %1807 = vmatprep.subr.bf16.mxu0 0
        %1808 = vmatpush1.bf16.msra.mxu0 0
        %1809 = vmatprep.subr.bf16.mxu0 0
        %1810 = vmatpush1.bf16.msra.mxu0 0
        %1811 = vmatprep.subr.bf16.mxu0 0
        %1812 = vmatpush1.bf16.msra.mxu0 0
        %1813 = vmatprep.subr.bf16.mxu0 0
        %1814 = vmatpush1.bf16.msra.mxu0 0
        %1815 = vmatprep.subr.bf16.mxu0 0
        %1816 = vmatpush1.bf16.msra.mxu0 0
        %1817 = vmatprep.subr.bf16.mxu0 0
        %1818 = vmatpush1.bf16.msra.mxu0 0
        %1819 = vmatprep.subr.bf16.mxu0 0
        %1820 = vmatpush1.bf16.msra.mxu0 0
        %1821 = vmatprep.subr.bf16.mxu0 0
        %1822 = vmatpush1.bf16.msra.mxu0 0
        %1823 = vmatprep.subr.bf16.mxu0 0
        %1824 = vmatpush1.bf16.msra.mxu0 0
        %1825 = vmatprep.subr.bf16.mxu0 0
        %1826 = vmatpush1.bf16.msra.mxu0 0
        %1827 = vmatprep.subr.bf16.mxu0 0
        %1828 = vmatpush1.bf16.msra.mxu0 0
        %1829 = vmatprep.mubr.bf16.mxu0 0
        %1830 = vmatmul.mubr.bf16.gmra.mrb[0].mxu0 %v1795
        %v1831 = vpop.f32.mrb[0].mxu0
        %v1832 = vadd.f32 0.0, %v1831
        %v1833 = vpop.f32.mrb[0].mxu0
        %v1834 = vpop.f32.mrb[0].mxu0
        %v1835 = vadd.f32 0.0, %v1834
        %v1836 = vpop.f32.mrb[0].mxu0
        %1837 = vdwg.mxu0
        %v1842 = vunpack.c.l.b16 %v1770
        %v1843 = vunpack.c.l.b16 %v1771
        %v1844 = vunpack.c.l.b16 %v1772
        %v1845 = vunpack.c.l.b16 %v1773
        %v1846 = vpack.c.b16 %v1843, %v1842
        %v1847 = vpack.c.b16 %v1845, %v1844
        %v1851 = vsel %vm1304, %v1763, 0
        %1853 = vmatprep.subr.bf16.mxu0 0
        %1854 = vmatpush1.bf16.msra.mxu0 %v1846
        %1855 = vmatprep.subr.bf16.mxu0 0
        %1856 = vmatpush1.bf16.msra.mxu0 %v1847
        %1857 = vmatprep.subr.bf16.mxu0 0
        %1858 = vmatpush1.bf16.msra.mxu0 0
        %1859 = vmatprep.subr.bf16.mxu0 0
        %1860 = vmatpush1.bf16.msra.mxu0 0
        %1861 = vmatprep.subr.bf16.mxu0 0
        %1862 = vmatpush1.bf16.msra.mxu0 0
        %1863 = vmatprep.subr.bf16.mxu0 0
        %1864 = vmatpush1.bf16.msra.mxu0 0
        %1865 = vmatprep.subr.bf16.mxu0 0
        %1866 = vmatpush1.bf16.msra.mxu0 0
        %1867 = vmatprep.subr.bf16.mxu0 0
        %1868 = vmatpush1.bf16.msra.mxu0 0
        %1869 = vmatprep.subr.bf16.mxu0 0
        %1870 = vmatpush1.bf16.msra.mxu0 0
        %1871 = vmatprep.subr.bf16.mxu0 0
        %1872 = vmatpush1.bf16.msra.mxu0 0
        %1873 = vmatprep.subr.bf16.mxu0 0
        %1874 = vmatpush1.bf16.msra.mxu0 0
        %1875 = vmatprep.subr.bf16.mxu0 0
        %1876 = vmatpush1.bf16.msra.mxu0 0
        %1877 = vmatprep.subr.bf16.mxu0 0
        %1878 = vmatpush1.bf16.msra.mxu0 0
        %1879 = vmatprep.subr.bf16.mxu0 0
        %1880 = vmatpush1.bf16.msra.mxu0 0
        %1881 = vmatprep.subr.bf16.mxu0 0
        %1882 = vmatpush1.bf16.msra.mxu0 0
        %1883 = vmatprep.subr.bf16.mxu0 0
        %1884 = vmatpush1.bf16.msra.mxu0 0
        %1885 = vmatprep.mubr.bf16.mxu0 0
        %1886 = vmatmul.mubr.bf16.gmra.mrb[0].mxu0 %v1851
        %v1887 = vpop.f32.mrb[0].mxu0
        %v1888 = vadd.f32 0.0, %v1887
        %v1889 = vpop.f32.mrb[0].mxu0
        %v1890 = vpop.f32.mrb[0].mxu0
        %v1891 = vadd.f32 0.0, %v1890
        %v1892 = vpop.f32.mrb[0].mxu0
        %1893 = vdwg.mxu0
        %v1898 = vunpack.c.l.b16 %v1774
        %v1899 = vunpack.c.l.b16 %v1775
        %v1900 = vunpack.c.l.b16 %v1776
        %v1901 = vunpack.c.l.b16 %v1777
        %v1902 = vpack.c.b16 %v1899, %v1898
        %v1903 = vpack.c.b16 %v1901, %v1900
        %v1907 = vsel %vm1304, %v1764, 0
        %1909 = vmatprep.subr.bf16.mxu0 0
        %1910 = vmatpush1.bf16.msra.mxu0 %v1902
        %1911 = vmatprep.subr.bf16.mxu0 0
        %1912 = vmatpush1.bf16.msra.mxu0 %v1903
        %1913 = vmatprep.subr.bf16.mxu0 0
        %1914 = vmatpush1.bf16.msra.mxu0 0
        %1915 = vmatprep.subr.bf16.mxu0 0
        %1916 = vmatpush1.bf16.msra.mxu0 0
        %1917 = vmatprep.subr.bf16.mxu0 0
        %1918 = vmatpush1.bf16.msra.mxu0 0
        %1919 = vmatprep.subr.bf16.mxu0 0
        %1920 = vmatpush1.bf16.msra.mxu0 0
        %1921 = vmatprep.subr.bf16.mxu0 0
        %1922 = vmatpush1.bf16.msra.mxu0 0
        %1923 = vmatprep.subr.bf16.mxu0 0
        %1924 = vmatpush1.bf16.msra.mxu0 0
        %1925 = vmatprep.subr.bf16.mxu0 0
        %1926 = vmatpush1.bf16.msra.mxu0 0
        %1927 = vmatprep.subr.bf16.mxu0 0
        %1928 = vmatpush1.bf16.msra.mxu0 0
        %1929 = vmatprep.subr.bf16.mxu0 0
        %1930 = vmatpush1.bf16.msra.mxu0 0
        %1931 = vmatprep.subr.bf16.mxu0 0
        %1932 = vmatpush1.bf16.msra.mxu0 0
        %1933 = vmatprep.subr.bf16.mxu0 0
        %1934 = vmatpush1.bf16.msra.mxu0 0
        %1935 = vmatprep.subr.bf16.mxu0 0
        %1936 = vmatpush1.bf16.msra.mxu0 0
        %1937 = vmatprep.subr.bf16.mxu0 0
        %1938 = vmatpush1.bf16.msra.mxu0 0
        %1939 = vmatprep.subr.bf16.mxu0 0
        %1940 = vmatpush1.bf16.msra.mxu0 0
        %1941 = vmatprep.mubr.bf16.mxu0 0
        %1942 = vmatmul.mubr.bf16.gmra.mrb[0].mxu0 %v1907
        %v1943 = vpop.f32.mrb[0].mxu0
        %v1944 = vadd.f32 0.0, %v1943
        %v1945 = vpop.f32.mrb[0].mxu0
        %v1946 = vpop.f32.mrb[0].mxu0
        %v1947 = vadd.f32 0.0, %v1946
        %v1948 = vpop.f32.mrb[0].mxu0
        %1949 = vdwg.mxu0
        %v1954 = vunpack.c.l.b16 %v1778
        %v1955 = vunpack.c.l.b16 %v1779
        %v1956 = vunpack.c.l.b16 %v1780
        %v1957 = vunpack.c.l.b16 %v1781
        %v1958 = vpack.c.b16 %v1955, %v1954
        %v1959 = vpack.c.b16 %v1957, %v1956
        %v1963 = vsel %vm1304, %v1765, 0
        %1965 = vmatprep.subr.bf16.mxu0 0
        %1966 = vmatpush1.bf16.msra.mxu0 %v1958
        %1967 = vmatprep.subr.bf16.mxu0 0
        %1968 = vmatpush1.bf16.msra.mxu0 %v1959
        %1969 = vmatprep.subr.bf16.mxu0 0
        %1970 = vmatpush1.bf16.msra.mxu0 0
        %1971 = vmatprep.subr.bf16.mxu0 0
        %1972 = vmatpush1.bf16.msra.mxu0 0
        %1973 = vmatprep.subr.bf16.mxu0 0
        %1974 = vmatpush1.bf16.msra.mxu0 0
        %1975 = vmatprep.subr.bf16.mxu0 0
        %1976 = vmatpush1.bf16.msra.mxu0 0
        %1977 = vmatprep.subr.bf16.mxu0 0
        %1978 = vmatpush1.bf16.msra.mxu0 0
        %1979 = vmatprep.subr.bf16.mxu0 0
        %1980 = vmatpush1.bf16.msra.mxu0 0
        %1981 = vmatprep.subr.bf16.mxu0 0
        %1982 = vmatpush1.bf16.msra.mxu0 0
        %1983 = vmatprep.subr.bf16.mxu0 0
        %1984 = vmatpush1.bf16.msra.mxu0 0
        %1985 = vmatprep.subr.bf16.mxu0 0
        %1986 = vmatpush1.bf16.msra.mxu0 0
        %1987 = vmatprep.subr.bf16.mxu0 0
        %1988 = vmatpush1.bf16.msra.mxu0 0
        %1989 = vmatprep.subr.bf16.mxu0 0
        %1990 = vmatpush1.bf16.msra.mxu0 0
        %1991 = vmatprep.subr.bf16.mxu0 0
        %1992 = vmatpush1.bf16.msra.mxu0 0
        %1993 = vmatprep.subr.bf16.mxu0 0
        %1994 = vmatpush1.bf16.msra.mxu0 0
        %1995 = vmatprep.subr.bf16.mxu0 0
        %1996 = vmatpush1.bf16.msra.mxu0 0
        %1997 = vmatprep.mubr.bf16.mxu0 0
        %1998 = vmatmul.mubr.bf16.gmra.mrb[0].mxu0 %v1963
        %v1999 = vpop.f32.mrb[0].mxu0
        %v2000 = vadd.f32 0.0, %v1999
        %v2001 = vpop.f32.mrb[0].mxu0
        %v2002 = vpop.f32.mrb[0].mxu0
        %v2003 = vadd.f32 0.0, %v2002
        %v2004 = vpop.f32.mrb[0].mxu0
        %2005 = vdwg.mxu0
        %v2006 = vadd.f32 %v1832, %v1888
        %v2007 = vadd.f32 %v2006, %v1944
        %v2008 = vadd.f32 %v2007, %v2000
        %v2009 = vadd.f32 %v1835, %v1891
        %v2010 = vadd.f32 %v2009, %v1947
        %v2011 = vadd.f32 %v2010, %v2003
        %v2012 = vld [vmem:[#allocation16] sm:$0x1]
        %v2014 = vlaneseq
        %v2015 = vshrl.u32 %v2014, 7
        %v2016 = vsub.s32 0, %v2015
        %v2017 = vrot.slane %v2012, %v2016
        %v2019 = vadd.f32 %v2008, %v2017
        %v2020 = vadd.f32 %v2011, %v2017
        %v2021 = vadd.f32 %v923, %v2019
        %v2022 = vadd.f32 %v926, %v2020
        %v2023 = vld [vmem:[#allocation17] sm:$0x1]
        %v2024 = vld [vmem:[#allocation19] sm:$0x1]
        %2025 = vadd.xlane.f32.xlu0 %v2021
        %v2026 = vpop.xlane.xlu0 %2025
        %2027 = vadd.xlane.f32.xlu0 %v2022
        %v2028 = vpop.xlane.xlu0 %2027
        %v2029 = vmul.f32 %v2026, %v935
        %v2030 = vmul.f32 %v2028, %v935
        %v2031 = vsub.f32 %v2021, %v2029
        %v2032 = vsub.f32 %v2022, %v2030
        %v2033 = vmul.f32 %v2031, %v2031
        %v2034 = vmul.f32 %v2032, %v2032
        %2035 = vadd.xlane.f32.xlu0 %v2033
        %v2036 = vpop.xlane.xlu0 %2035
        %2037 = vadd.xlane.f32.xlu0 %v2034
        %v2038 = vpop.xlane.xlu0 %2037
        %v2039 = vmul.f32 %v2036, %v935
        %v2040 = vmul.f32 %v2038, %v935
        %v2041 = vadd.f32 %v2039, 1e-06
        %v2042 = vadd.f32 %v2040, 1e-06
        %v2043 = vrsqrt.pop %v2041
        %v2044 = vrsqrt.pop %v2042
        %v2045 = vmul.f32 %v2031, %v2043
        %v2046 = vmul.f32 %v2032, %v2044
        %v2048 = vlaneseq
        %v2049 = vshrl.u32 %v2048, 7
        %v2050 = vsub.s32 0, %v2049
        %v2051 = vrot.slane %v2023, %v2050
        %v2053 = vmul.f32 %v2045, %v2051
        %v2054 = vmul.f32 %v2046, %v2051
        %v2056 = vlaneseq
        %v2057 = vshrl.u32 %v2056, 7
        %v2058 = vsub.s32 0, %v2057
        %v2059 = vrot.slane %v2024, %v2058
        %v2061 = vadd.f32 %v2053, %v2059
        %v2062 = vadd.f32 %v2054, %v2059
        %v2063 = vpack.c.bf16 %v2062, %v2061
        %v2064 = vld [vmem:[#allocation20] sm:$0xff]
        %v2065 = vld [vmem:[#allocation20 + $0x8] sm:$0xff]
        %v2066 = vld [vmem:[#allocation20 + $0x10] sm:$0xff]
        %v2067 = vld [vmem:[#allocation20 + $0x18] sm:$0xff]
        %v2068 = vld [vmem:[#allocation20 + $0x20] sm:$0xff]
        %v2069 = vld [vmem:[#allocation20 + $0x28] sm:$0xff]
        %v2070 = vld [vmem:[#allocation20 + $0x30] sm:$0xff]
        %v2071 = vld [vmem:[#allocation20 + $0x38] sm:$0xff]
        %v2072 = vld [vmem:[#allocation20 + $0x40] sm:$0xff]
        %v2073 = vld [vmem:[#allocation20 + $0x48] sm:$0xff]
        %v2074 = vld [vmem:[#allocation20 + $0x50] sm:$0xff]
        %v2075 = vld [vmem:[#allocation20 + $0x58] sm:$0xff]
        %v2076 = vld [vmem:[#allocation20 + $0x60] sm:$0xff]
        %v2077 = vld [vmem:[#allocation20 + $0x68] sm:$0xff]
        %v2078 = vld [vmem:[#allocation20 + $0x70] sm:$0xff]
        %v2079 = vld [vmem:[#allocation20 + $0x78] sm:$0xff]
        %v2080 = vld [vmem:[#allocation22] sm:$0x3]
        %v2082 = vlaneseq
        %v2083 = vshrl.u32 %v2082, 7
        %v2084 = vsub.s32 0, %v2083
        %v2085 = vrot.slane %v2080, %v2084
        %v2086 = vlaneseq
        %v2087 = vshrl.u32 %v2086, 7
        %v2088 = vsub.s32 1, %v2087
        %v2089 = vrot.slane %v2080, %v2088
        %v2108 = vunpack.c.l.b16 %v2064
        %v2109 = vunpack.c.h.b16 %v2064
        %v2110 = vunpack.c.l.b16 %v2065
        %v2111 = vunpack.c.h.b16 %v2065
        %v2112 = vunpack.c.l.b16 %v2066
        %v2113 = vunpack.c.h.b16 %v2066
        %v2114 = vunpack.c.l.b16 %v2067
        %v2115 = vunpack.c.h.b16 %v2067
        %v2116 = vunpack.c.l.b16 %v2068
        %v2117 = vunpack.c.h.b16 %v2068
        %v2118 = vunpack.c.l.b16 %v2069
        %v2119 = vunpack.c.h.b16 %v2069
        %v2120 = vunpack.c.l.b16 %v2070
        %v2121 = vunpack.c.h.b16 %v2070
        %v2122 = vunpack.c.l.b16 %v2071
        %v2123 = vunpack.c.h.b16 %v2071
        %v2124 = vunpack.c.l.b16 %v2072
        %v2125 = vunpack.c.h.b16 %v2072
        %v2126 = vunpack.c.l.b16 %v2073
        %v2127 = vunpack.c.h.b16 %v2073
        %v2128 = vunpack.c.l.b16 %v2074
        %v2129 = vunpack.c.h.b16 %v2074
        %v2130 = vunpack.c.l.b16 %v2075
        %v2131 = vunpack.c.h.b16 %v2075
        %v2132 = vunpack.c.l.b16 %v2076
        %v2133 = vunpack.c.h.b16 %v2076
        %v2134 = vunpack.c.l.b16 %v2077
        %v2135 = vunpack.c.h.b16 %v2077
        %v2136 = vunpack.c.l.b16 %v2078
        %v2137 = vunpack.c.h.b16 %v2078
        %v2138 = vunpack.c.l.b16 %v2079
        %v2139 = vunpack.c.h.b16 %v2079
        %v2140 = vpack.c.b16 %v2110, %v2108
        %v2141 = vpack.c.b16 %v2111, %v2109
        %v2142 = vpack.c.b16 %v2114, %v2112
        %v2143 = vpack.c.b16 %v2115, %v2113
        %v2144 = vpack.c.b16 %v2118, %v2116
        %v2145 = vpack.c.b16 %v2119, %v2117
        %v2146 = vpack.c.b16 %v2122, %v2120
        %v2147 = vpack.c.b16 %v2123, %v2121
        %v2148 = vpack.c.b16 %v2126, %v2124
        %v2149 = vpack.c.b16 %v2127, %v2125
        %v2150 = vpack.c.b16 %v2130, %v2128
        %v2151 = vpack.c.b16 %v2131, %v2129
        %v2152 = vpack.c.b16 %v2134, %v2132
        %v2153 = vpack.c.b16 %v2135, %v2133
        %v2154 = vpack.c.b16 %v2138, %v2136
        %v2155 = vpack.c.b16 %v2139, %v2137
        %2172 = vmatprep.subr.bf16.mxu0 %v2141
        %2173 = vmatpush1.bf16.msra.mxu0 %v2140
        %2174 = vmatprep.subr.bf16.mxu0 %v2143
        %2175 = vmatpush1.bf16.msra.mxu0 %v2142
        %2176 = vmatprep.subr.bf16.mxu0 %v2145
        %2177 = vmatpush1.bf16.msra.mxu0 %v2144
        %2178 = vmatprep.subr.bf16.mxu0 %v2147
        %2179 = vmatpush1.bf16.msra.mxu0 %v2146
        %2180 = vmatprep.subr.bf16.mxu0 %v2149
        %2181 = vmatpush1.bf16.msra.mxu0 %v2148
        %2182 = vmatprep.subr.bf16.mxu0 %v2151
        %2183 = vmatpush1.bf16.msra.mxu0 %v2150
        %2184 = vmatprep.subr.bf16.mxu0 %v2153
        %2185 = vmatpush1.bf16.msra.mxu0 %v2152
        %2186 = vmatprep.subr.bf16.mxu0 %v2155
        %2187 = vmatpush1.bf16.msra.mxu0 %v2154
        %2188 = vmatprep.subr.bf16.mxu0 0
        %2189 = vmatpush1.bf16.msra.mxu0 0
        %2190 = vmatprep.subr.bf16.mxu0 0
        %2191 = vmatpush1.bf16.msra.mxu0 0
        %2192 = vmatprep.subr.bf16.mxu0 0
        %2193 = vmatpush1.bf16.msra.mxu0 0
        %2194 = vmatprep.subr.bf16.mxu0 0
        %2195 = vmatpush1.bf16.msra.mxu0 0
        %2196 = vmatprep.subr.bf16.mxu0 0
        %2197 = vmatpush1.bf16.msra.mxu0 0
        %2198 = vmatprep.subr.bf16.mxu0 0
        %2199 = vmatpush1.bf16.msra.mxu0 0
        %2200 = vmatprep.subr.bf16.mxu0 0
        %2201 = vmatpush1.bf16.msra.mxu0 0
        %2202 = vmatprep.subr.bf16.mxu0 0
        %2203 = vmatpush1.bf16.msra.mxu0 0
        %2204 = vmatprep.mubr.bf16.mxu0 0
        %2205 = vmatmul.mubr.bf16.gmra.mrb[0].mxu0 %v2063
        %v2206 = vpop.f32.mrb[0].mxu0
        %v2207 = vadd.f32 %v2085, %v2206
        %v2208 = vpop.f32.mrb[0].mxu0
        %v2209 = vadd.f32 %v2089, %v2208
        %v2210 = vpop.f32.mrb[0].mxu0
        %v2211 = vadd.f32 %v2085, %v2210
        %v2212 = vpop.f32.mrb[0].mxu0
        %v2213 = vadd.f32 %v2089, %v2212
        %2214 = vdwg.mxu0
        %v2215 = vmul.f32 %v2207, 0.5
        %v2216 = vmul.f32 %v2209, 0.5
        %v2217 = vmul.f32 %v2211, 0.5
        %v2218 = vmul.f32 %v2213, 0.5
        %v2219 = vmul.f32 %v2207, 0.044715
        %v2220 = vmul.f32 %v2209, 0.044715
        %v2221 = vmul.f32 %v2211, 0.044715
        %v2222 = vmul.f32 %v2213, 0.044715
        %v2223 = vmul.f32 %v2219, %v2207
        %v2224 = vmul.f32 %v2220, %v2209
        %v2225 = vmul.f32 %v2221, %v2211
        %v2226 = vmul.f32 %v2222, %v2213
        %v2227 = vmul.f32 %v2223, %v2207
        %v2228 = vmul.f32 %v2224, %v2209
        %v2229 = vmul.f32 %v2225, %v2211
        %v2230 = vmul.f32 %v2226, %v2213
        %v2231 = vadd.f32 %v2207, %v2227
        %v2232 = vadd.f32 %v2209, %v2228
        %v2233 = vadd.f32 %v2211, %v2229
        %v2234 = vadd.f32 %v2213, %v2230
        %v2235 = vmul.f32 %v2231, 0.7978846
        %v2236 = vmul.f32 %v2232, 0.7978846
        %v2237 = vmul.f32 %v2233, 0.7978846
        %v2238 = vmul.f32 %v2234, 0.7978846
        %v2239 = vtanh.pop %v2235
        %v2240 = vtanh.pop %v2236
        %v2241 = vtanh.pop %v2237
        %v2242 = vtanh.pop %v2238
        %v2243 = vadd.f32 %v2239, 1.0
        %v2244 = vadd.f32 %v2240, 1.0
        %v2245 = vadd.f32 %v2241, 1.0
        %v2246 = vadd.f32 %v2242, 1.0
        %v2247 = vmul.f32 %v2215, %v2243
        %v2248 = vmul.f32 %v2216, %v2244
        %v2249 = vmul.f32 %v2217, %v2245
        %v2250 = vmul.f32 %v2218, %v2246
        %v2251 = vpack.c.bf16 %v2249, %v2247
        %v2252 = vpack.c.bf16 %v2250, %v2248
        %v2253 = vld [vmem:[#allocation23] sm:$0xf]
        %v2254 = vld [vmem:[#allocation23 + $0x4] sm:$0xf]
        %v2255 = vld [vmem:[#allocation23 + $0x8] sm:$0xf]
        %v2256 = vld [vmem:[#allocation23 + $0xc] sm:$0xf]
        %v2257 = vld [vmem:[#allocation23 + $0x10] sm:$0xf]
        %v2258 = vld [vmem:[#allocation23 + $0x14] sm:$0xf]
        %v2259 = vld [vmem:[#allocation23 + $0x18] sm:$0xf]
        %v2260 = vld [vmem:[#allocation23 + $0x1c] sm:$0xf]
        %v2261 = vld [vmem:[#allocation23 + $0x20] sm:$0xf]
        %v2262 = vld [vmem:[#allocation23 + $0x24] sm:$0xf]
        %v2263 = vld [vmem:[#allocation23 + $0x28] sm:$0xf]
        %v2264 = vld [vmem:[#allocation23 + $0x2c] sm:$0xf]
        %v2265 = vld [vmem:[#allocation23 + $0x30] sm:$0xf]
        %v2266 = vld [vmem:[#allocation23 + $0x34] sm:$0xf]
        %v2267 = vld [vmem:[#allocation23 + $0x38] sm:$0xf]
        %v2268 = vld [vmem:[#allocation23 + $0x3c] sm:$0xf]
        %v2269 = vld [vmem:[#allocation23 + $0x40] sm:$0xf]
        %v2270 = vld [vmem:[#allocation23 + $0x44] sm:$0xf]
        %v2271 = vld [vmem:[#allocation23 + $0x48] sm:$0xf]
        %v2272 = vld [vmem:[#allocation23 + $0x4c] sm:$0xf]
        %v2273 = vld [vmem:[#allocation23 + $0x50] sm:$0xf]
        %v2274 = vld [vmem:[#allocation23 + $0x54] sm:$0xf]
        %v2275 = vld [vmem:[#allocation23 + $0x58] sm:$0xf]
        %v2276 = vld [vmem:[#allocation23 + $0x5c] sm:$0xf]
        %v2277 = vld [vmem:[#allocation23 + $0x60] sm:$0xf]
        %v2278 = vld [vmem:[#allocation23 + $0x64] sm:$0xf]
        %v2279 = vld [vmem:[#allocation23 + $0x68] sm:$0xf]
        %v2280 = vld [vmem:[#allocation23 + $0x6c] sm:$0xf]
        %v2281 = vld [vmem:[#allocation23 + $0x70] sm:$0xf]
        %v2282 = vld [vmem:[#allocation23 + $0x74] sm:$0xf]
        %v2283 = vld [vmem:[#allocation23 + $0x78] sm:$0xf]
        %v2284 = vld [vmem:[#allocation23 + $0x7c] sm:$0xf]
        %v2285 = vld [vmem:[#allocation25] sm:$0x1]
        %v2287 = vlaneseq
        %v2288 = vshrl.u32 %v2287, 7
        %v2289 = vsub.s32 0, %v2288
        %v2290 = vrot.slane %v2285, %v2289
        %v2324 = vunpack.c.l.b16 %v2253
        %v2325 = vunpack.c.l.b16 %v2254
        %v2326 = vunpack.c.l.b16 %v2255
        %v2327 = vunpack.c.l.b16 %v2256
        %v2328 = vunpack.c.l.b16 %v2257
        %v2329 = vunpack.c.l.b16 %v2258
        %v2330 = vunpack.c.l.b16 %v2259
        %v2331 = vunpack.c.l.b16 %v2260
        %v2332 = vunpack.c.l.b16 %v2261
        %v2333 = vunpack.c.l.b16 %v2262
        %v2334 = vunpack.c.l.b16 %v2263
        %v2335 = vunpack.c.l.b16 %v2264
        %v2336 = vunpack.c.l.b16 %v2265
        %v2337 = vunpack.c.l.b16 %v2266
        %v2338 = vunpack.c.l.b16 %v2267
        %v2339 = vunpack.c.l.b16 %v2268
        %v2340 = vunpack.c.l.b16 %v2269
        %v2341 = vunpack.c.l.b16 %v2270
        %v2342 = vunpack.c.l.b16 %v2271
        %v2343 = vunpack.c.l.b16 %v2272
        %v2344 = vunpack.c.l.b16 %v2273
        %v2345 = vunpack.c.l.b16 %v2274
        %v2346 = vunpack.c.l.b16 %v2275
        %v2347 = vunpack.c.l.b16 %v2276
        %v2348 = vunpack.c.l.b16 %v2277
        %v2349 = vunpack.c.l.b16 %v2278
        %v2350 = vunpack.c.l.b16 %v2279
        %v2351 = vunpack.c.l.b16 %v2280
        %v2352 = vunpack.c.l.b16 %v2281
        %v2353 = vunpack.c.l.b16 %v2282
        %v2354 = vunpack.c.l.b16 %v2283
        %v2355 = vunpack.c.l.b16 %v2284
        %v2356 = vpack.c.b16 %v2325, %v2324
        %v2357 = vpack.c.b16 %v2327, %v2326
        %v2358 = vpack.c.b16 %v2329, %v2328
        %v2359 = vpack.c.b16 %v2331, %v2330
        %v2360 = vpack.c.b16 %v2333, %v2332
        %v2361 = vpack.c.b16 %v2335, %v2334
        %v2362 = vpack.c.b16 %v2337, %v2336
        %v2363 = vpack.c.b16 %v2339, %v2338
        %v2364 = vpack.c.b16 %v2341, %v2340
        %v2365 = vpack.c.b16 %v2343, %v2342
        %v2366 = vpack.c.b16 %v2345, %v2344
        %v2367 = vpack.c.b16 %v2347, %v2346
        %v2368 = vpack.c.b16 %v2349, %v2348
        %v2369 = vpack.c.b16 %v2351, %v2350
        %v2370 = vpack.c.b16 %v2353, %v2352
        %v2371 = vpack.c.b16 %v2355, %v2354
        %2388 = vmatprep.subr.bf16.mxu0 0
        %2389 = vmatpush1.bf16.msra.mxu0 %v2356
        %2390 = vmatprep.subr.bf16.mxu0 0
        %2391 = vmatpush1.bf16.msra.mxu0 %v2357
        %2392 = vmatprep.subr.bf16.mxu0 0
        %2393 = vmatpush1.bf16.msra.mxu0 %v2358
        %2394 = vmatprep.subr.bf16.mxu0 0
        %2395 = vmatpush1.bf16.msra.mxu0 %v2359
        %2396 = vmatprep.subr.bf16.mxu0 0
        %2397 = vmatpush1.bf16.msra.mxu0 %v2360
        %2398 = vmatprep.subr.bf16.mxu0 0
        %2399 = vmatpush1.bf16.msra.mxu0 %v2361
        %2400 = vmatprep.subr.bf16.mxu0 0
        %2401 = vmatpush1.bf16.msra.mxu0 %v2362
        %2402 = vmatprep.subr.bf16.mxu0 0
        %2403 = vmatpush1.bf16.msra.mxu0 %v2363
        %2404 = vmatprep.subr.bf16.mxu0 0
        %2405 = vmatpush1.bf16.msra.mxu0 %v2364
        %2406 = vmatprep.subr.bf16.mxu0 0
        %2407 = vmatpush1.bf16.msra.mxu0 %v2365
        %2408 = vmatprep.subr.bf16.mxu0 0
        %2409 = vmatpush1.bf16.msra.mxu0 %v2366
        %2410 = vmatprep.subr.bf16.mxu0 0
        %2411 = vmatpush1.bf16.msra.mxu0 %v2367
        %2412 = vmatprep.subr.bf16.mxu0 0
        %2413 = vmatpush1.bf16.msra.mxu0 %v2368
        %2414 = vmatprep.subr.bf16.mxu0 0
        %2415 = vmatpush1.bf16.msra.mxu0 %v2369
        %2416 = vmatprep.subr.bf16.mxu0 0
        %2417 = vmatpush1.bf16.msra.mxu0 %v2370
        %2418 = vmatprep.subr.bf16.mxu0 0
        %2419 = vmatpush1.bf16.msra.mxu0 %v2371
        %2420 = vmatprep.mubr.bf16.mxu0 %v2252
        %2421 = vmatmul.mubr.bf16.gmra.mrb[0].mxu0 %v2251
        %v2422 = vpop.f32.mrb[0].mxu0
        %v2423 = vadd.f32 %v2290, %v2422
        %v2424 = vpop.f32.mrb[0].mxu0
        %v2425 = vpop.f32.mrb[0].mxu0
        %v2426 = vadd.f32 %v2290, %v2425
        %v2427 = vpop.f32.mrb[0].mxu0
        %2428 = vdwg.mxu0
        %v2429 = vld [vmem:[#allocation26] sm:$0x1]
        %v2430 = vld [vmem:[#allocation28] sm:$0x1]
        %2431 = vadd.xlane.f32.xlu0 %v2423
        %v2432 = vpop.xlane.xlu0 %2431
        %2433 = vadd.xlane.f32.xlu0 %v2426
        %v2434 = vpop.xlane.xlu0 %2433
        %v2435 = vmul.f32 %v2432, %v935
        %v2436 = vmul.f32 %v2434, %v935
        %v2437 = vsub.f32 %v2423, %v2435
        %v2438 = vsub.f32 %v2426, %v2436
        %v2439 = vmul.f32 %v2437, %v2437
        %v2440 = vmul.f32 %v2438, %v2438
        %2441 = vadd.xlane.f32.xlu0 %v2439
        %v2442 = vpop.xlane.xlu0 %2441
        %2443 = vadd.xlane.f32.xlu0 %v2440
        %v2444 = vpop.xlane.xlu0 %2443
        %v2445 = vmul.f32 %v2442, %v935
        %v2446 = vmul.f32 %v2444, %v935
        %v2447 = vadd.f32 %v2445, 1e-06
        %v2448 = vadd.f32 %v2446, 1e-06
        %v2449 = vrsqrt.pop %v2447
        %v2450 = vrsqrt.pop %v2448
        %v2451 = vmul.f32 %v2437, %v2449
        %v2452 = vmul.f32 %v2438, %v2450
        %v2454 = vlaneseq
        %v2455 = vshrl.u32 %v2454, 7
        %v2456 = vsub.s32 0, %v2455
        %v2457 = vrot.slane %v2429, %v2456
        %v2459 = vmul.f32 %v2451, %v2457
        %v2460 = vmul.f32 %v2452, %v2457
        %v2462 = vlaneseq
        %v2463 = vshrl.u32 %v2462, 7
        %v2464 = vsub.s32 0, %v2463
        %v2465 = vrot.slane %v2430, %v2464
        %v2467 = vadd.f32 %v2459, %v2465
        %v2468 = vadd.f32 %v2460, %v2465
        %2469 = vst [vmem:[%s778] sm:$0xff] %v2467
        %2470 = vst [vmem:[%s778 + $0x8] sm:$0xff] %v2468
        %s2471 = sand.u32 %s412, 1
        %s2472 = scalar_lea.sflag [#allocation4], %s2471
        %s2473 = sand.u32 %s412, 1
        %s2474 = smul.addr %s2473, 16
        %s2475 = scalar_lea.vmem [#allocation29], %s2474
        // Predicated region
        $region157: #{tpu_custom_call.1} parent=87 // pred_check
          %p2476 = pneg %p422
        $region158: #{tpu_custom_call.1} parent=87 // pred_check_branch
          %2478 = sbr.rel (%p2476) target = $region160
        $region159: #{tpu_custom_call.1} parent=87 // pred_region
          %s2480 = ssub.s32 256, 256
          %2481 = vsyncadd %s2472, %s2480
          %s2482 = smul.addr %s42, 2
          %s2483 = smul.addr %s2482, 128
          %s2484 = scalar_lea.hbm %s17, %s2483
          %s2485 = sshll.u32 %s2475, 4
          %s2486 = int_to_ptr.vmem [resolvable:$true] %s2485
          %2491 = dma.vmem_to_hbm [thread:$0]  %s2486, 256, %s2484, %s2472, 128, 128, 8
        $region160: #{tpu_custom_call.1} parent=87 // pred_fallthru
          _
      $region88: #{tpu_custom_call.1} parent=5 // pred_fallthru
        _
      %p2492 = scmp.le.s32.totalorder 2, %s37
      // Predicated region
      $region161: #{tpu_custom_call.1} parent=5 // pred_check
        %p2493 = pneg %p2492
      $region162: #{tpu_custom_call.1} parent=5 // pred_check_branch
        %2495 = sbr.rel (%p2493) target = $region164
      $region163: #{tpu_custom_call.1} parent=5 // pred_region
        %s2496 = ssub.s32 %s37, 2
        // Predicated region
        $region165: #{tpu_custom_call.1} parent=163 // pred_check
          %p2497 = pneg %p428
        $region166: #{tpu_custom_call.1} parent=163 // pred_check_branch
          %2499 = sbr.rel (%p2497) target = $region168
        $region167: #{tpu_custom_call.1} parent=163 // pred_region
          %s2500 = sand.u32 %s413, 1
          %s2501 = scalar_lea.sflag [#allocation4], %s2500
          %s2502 = sand.u32 %s413, 1
          %s2503 = smul.addr %s2502, 16
          %s2504 = scalar_lea.vmem [#allocation29], %s2503
          %2505 = dma.done %s2501, 256
        $region168: #{tpu_custom_call.1} parent=163 // pred_fallthru
          _
      $region164: #{tpu_custom_call.1} parent=5 // pred_fallthru
        _
    $region6: #{tpu_custom_call.1} parent=1 // loop_footer
      %s41 = sadd.s32 1, %s37
    $region7: #{tpu_custom_call.1} parent=1 // loop_footer_branch
      %36 = sbr.rel target = $region3
    $region8: #{tpu_custom_call.1} parent=1 // loop_exit
      _
    %2506 = vsyncpa [#allocation3], 1
    %s2507 = scalar_lea.sflag [#allocation3], 1
    %2508 = vsyncpa %s2507, 1
    %2509 = vsyncpa [#allocation6], 1
    %2510 = vsyncpa [#allocation9], 1
    %2511 = vsyncpa [#allocation12], 1
    %2512 = vsyncpa [#allocation15], 1
    %2513 = vsyncpa [#allocation18], 1
    %2514 = vsyncpa [#allocation21], 1
    %2515 = vsyncpa [#allocation24], 1
    %2516 = vsyncpa [#allocation27], 1
    %2517 = vsyncpa [#allocation4], 1
    %s2518 = scalar_lea.sflag [#allocation4], 1
    %2519 = vsyncpa %s2518, 1

</llo_original>
